<compile_context>
chip_gen: v7x
topology: tpu7x:2x2x1
jax: 0.10.0
libtpu: 0.0.40
codegen_flags: <defaults>
</compile_context>

<pallas_src>
import functools

import jax
import jax.numpy as jnp
from jax.experimental import pallas as pl
from jax.experimental.pallas import tpu as pltpu


def _round_up(x, m):
    return (x + m - 1) // m * m


def _dwconv_bn_kernel(w_ref, b_ref, x_ref, o_ref, pad_ref, *,
                      K, H, W, Ho, Wo, pad, c_blk, wl, row_off):
    """One (batch, channel-block) step.

    w_ref:   (C*K*K,) SMEM   depthwise weights with BN scale folded in (f32)
    b_ref:   (C,)     SMEM   folded per-channel bias (f32)
    x_ref:   (c_blk, H, W)   VMEM input block, caller dtype
    o_ref:   (c_blk, Ho, Wo) VMEM output block, caller dtype
    pad_ref: (Hs, wl) f32    VMEM scratch: one padded plane, reused per channel
    """
    f32 = jnp.float32
    cb = pl.program_id(1)
    RS = 8                                   # sublane strip height
    n_full = Ho // RS
    rs_tail = Ho - n_full * RS

    # One full, unmasked clear per grid step (NOT per channel, NOT guarded by
    # "first step only": each TensorCore has its own scratch when the grid is
    # split across cores).  The per-channel centre copy below never touches
    # the halo rows or the zero lanes >= W, so one clear per step suffices.
    pad_ref[...] = jnp.zeros_like(pad_ref)

    def one_channel(c):
        # Upcast + copy the (H, W) plane into the scratch centre once:
        # rows at sublane-aligned offset row_off (8), lanes at offset 0.
        pad_ref[row_off:row_off + H, 0:W] = x_ref[c].astype(f32)

        gc = cb * c_blk + c                   # global channel index
        base = gc * (K * K)
        # Hoist the K*K weight scalars and the bias out of the strip loop.
        w = [w_ref[base + i] for i in range(K * K)]
        bias = b_ref[gc]

        def strip(r0, rs):
            # Full-lane (rs, wl) accumulator; bias folded into the init.
            acc = jnp.full((rs, wl), bias, f32)
            for kh in range(K):
                xs = pad_ref[pl.ds(r0 + row_off - pad + kh, rs), :]
                for kw in range(K):
                    sh = (pad - kw) % wl
                    # Horizontal taps via lane rotation (XLU) instead of
                    # lane-misaligned reloads; wrapped-in lanes are zero
                    # (lanes >= W stay cleared), providing the W halo.
                    tap = pltpu.roll(xs, shift=sh, axis=1) if sh else xs
                    acc = acc + tap * w[kh * K + kw]
            o_ref[c, pl.ds(r0, rs), :] = acc[:, :Wo].astype(o_ref.dtype)

        if n_full <= 8:                       # short plane: full static unroll
            for i in range(n_full):
                strip(i * RS, RS)
        else:                                 # long plane: bounded code size
            @pl.loop(0, n_full)
            def _(i):
                strip(pl.multiple_of(i * RS, RS), RS)
        if rs_tail:
            strip(n_full * RS, rs_tail)

    if c_blk <= 8:                            # small block: static channels
        for c in range(c_blk):
            one_channel(c)
    else:                                     # large block: dynamic channels
        @pl.loop(0, c_blk)
        def _(c):
            one_channel(c)


def _pick_c_blk(C, H, W, itemsize, n_batch, target_bytes=2 << 20):
    """Largest channel-block divisor of C whose input block is <= ~2 MiB
    (big DMAs ~ HBM roofline), capped so a single-image batch still produces
    >= 2 grid steps (second TensorCore / megacore stays busy)."""
    cap = C if n_batch >= 2 else max(1, C // 2)
    best = 1
    for d in range(1, C + 1):
        if C % d == 0 and d <= cap and d * H * W * itemsize <= target_bytes:
            best = d
    return best


def depthwise_conv2d_bn(x_nchw, weight, conv_bias, gamma, beta,
                        running_mean, running_var, *,
                        stride=1, padding=1, eps=1e-5):
    """Fused nn.Conv2d(C, C, K, groups=C, stride=1, padding, bias=True) +
    nn.BatchNorm2d(C) (eval mode, running stats).  NCHW in, NCHW out, in the
    caller's dtype; f32 accumulation happens inside the kernel."""
    assert stride == 1, "Pallas kernel assumes stride=1 (ShuffleNet depthwise usage)"
    N, C, H, W = x_nchw.shape
    K = weight.shape[-1]
    assert weight.shape == (C, 1, K, K), "expected depthwise (groups=C) weight"
    assert 0 < padding <= 8
    Ho = H + 2 * padding - K + 1
    Wo = W + 2 * padding - K + 1

    f32 = jnp.float32
    # ---- host-side parameter folding (tiny, per-channel) ----
    inv_std = 1.0 / jnp.sqrt(running_var.astype(f32) + eps)
    scale = gamma.astype(f32) * inv_std                               # (C,)
    w_folded = weight[:, 0].astype(f32) * scale[:, None, None]        # (C, K, K)
    w_flat = w_folded.reshape(C * K * K)                              # 1-D SMEM table
    bias = (beta.astype(f32)
            + (conv_bias.astype(f32) - running_mean.astype(f32)) * scale)  # (C,)

    itemsize = jnp.dtype(x_nchw.dtype).itemsize
    c_blk = _pick_c_blk(C, H, W, itemsize, N)
    row_off = 8                                          # sublane-aligned top halo
    hs = _round_up(row_off + H + padding, 8)             # scratch rows
    wl = _round_up(W + padding, 128)                     # lane-aligned scratch width

    kernel = functools.partial(_dwconv_bn_kernel, K=K, H=H, W=W, Ho=Ho, Wo=Wo,
                               pad=padding, c_blk=c_blk, wl=wl, row_off=row_off)

    return pl.pallas_call(
        kernel,
        out_shape=jax.ShapeDtypeStruct((N, C, Ho, Wo), x_nchw.dtype),
        grid_spec=pltpu.PrefetchScalarGridSpec(
            num_scalar_prefetch=0,
            grid=(N, C // c_blk),
            in_specs=[
                pl.BlockSpec(memory_space=pltpu.MemorySpace.SMEM),     # w_flat
                pl.BlockSpec(memory_space=pltpu.MemorySpace.SMEM),     # bias
                pl.BlockSpec((None, c_blk, H, W), lambda n, cb: (n, cb, 0, 0)),
            ],
            out_specs=pl.BlockSpec((None, c_blk, Ho, Wo),
                                   lambda n, cb: (n, cb, 0, 0)),
            scratch_shapes=[pltpu.VMEM((hs, wl), f32)],
        ),
        compiler_params=pltpu.CompilerParams(
            dimension_semantics=("parallel", "parallel")),
    )(w_flat, bias, x_nchw)


def _reference(x, weight, conv_bias, gamma, beta, mean, var, padding=1, eps=1e-5):
    f32 = jnp.float32
    N, C, H, W = x.shape
    K = weight.shape[-1]
    Ho = H + 2 * padding - K + 1
    Wo = W + 2 * padding - K + 1
    xp = jnp.pad(x.astype(f32),
                 ((0, 0), (0, 0), (padding, padding), (padding, padding)))
    out = jnp.zeros((N, C, Ho, Wo), f32)
    for kh in range(K):
        for kw in range(K):
            out = out + (xp[:, :, kh:kh + Ho, kw:kw + Wo]
                         * weight[:, 0, kh, kw].astype(f32)[None, :, None, None])
    out = out + conv_bias.astype(f32)[None, :, None, None]
    out = ((out - mean.astype(f32)[None, :, None, None])
           / jnp.sqrt(var.astype(f32)[None, :, None, None] + eps)
           * gamma.astype(f32)[None, :, None, None]
           + beta.astype(f32)[None, :, None, None])
    return out


if __name__ == "__main__":
    key = jax.random.PRNGKey(0)

    def make_case(k, N, C, H, W, K=3, dtype=jnp.float32):
        kx, kw, kb, kg, kbt, km, kv = jax.random.split(k, 7)
        x = jax.random.normal(kx, (N, C, H, W), dtype=jnp.float32).astype(dtype)
        weight = jax.random.normal(kw, (C, 1, K, K), dtype=jnp.float32) * 0.1
        conv_bias = jax.random.normal(kb, (C,), dtype=jnp.float32) * 0.1
        gamma = 1.0 + 0.1 * jax.random.normal(kg, (C,), dtype=jnp.float32)
        beta = 0.1 * jax.random.normal(kbt, (C,), dtype=jnp.float32)
        mean = 0.1 * jax.random.normal(km, (C,), dtype=jnp.float32)
        var = jnp.abs(1.0 + 0.1 * jax.random.normal(kv, (C,), dtype=jnp.float32))
        return x, weight, conv_bias, gamma, beta, mean, var

    k1, k2, k3 = jax.random.split(key, 3)

    # Case 1: nominal small shape (batch=2, C=4, 16x16), f32.
    args = make_case(k1, 2, 4, 16, 16)
    out = jax.block_until_ready(depthwise_conv2d_bn(*args, padding=1))
    ref = _reference(*args, padding=1)
    assert out.shape == ref.shape and out.dtype == jnp.float32
    assert jnp.allclose(out, ref, atol=1e-4, rtol=1e-4)

    # Case 2: W > 128 (multi-vreg lanes + roll), tail strip (Ho % 8 != 0),
    # dynamic strip loop (Ho // 8 > 8) and multiple channel-blocks (N=1 splits
    # the grid along C so both TensorCores get work).
    args = make_case(k2, 1, 6, 76, 144)
    out = jax.block_until_ready(depthwise_conv2d_bn(*args, padding=1))
    ref = _reference(*args, padding=1)
    assert out.shape == ref.shape
    assert jnp.allclose(out, ref, atol=1e-4, rtol=1e-4)

    # Case 3: bf16 end-to-end (HBM traffic stays bf16; f32 accumulate inside).
    args = make_case(k3, 2, 4, 16, 16, dtype=jnp.bfloat16)
    out = jax.block_until_ready(depthwise_conv2d_bn(*args, padding=1))
    assert out.dtype == jnp.bfloat16
    ref = _reference(*args, padding=1)
    assert jnp.allclose(out.astype(jnp.float32), ref, atol=5e-2, rtol=5e-2)

    print("KERNEL_OK")
</pallas_src>

<mosaic_0001>
module attributes {stable_mosaic.version = 11 : i64} {
  func.func @_dwconv_bn_kernel(%arg0: i32, %arg1: i32, %arg2: memref<36xf32, #tpu.memory_space<smem>>, %arg3: memref<4xf32, #tpu.memory_space<smem>>, %arg4: memref<1x4x16x16xf32, #tpu.memory_space<vmem>>, %arg5: memref<1x4x16x16xf32, #tpu.memory_space<vmem>>, %arg6: memref<32x128xf32, #tpu.memory_space<vmem>>) attributes {dimension_semantics = [#tpu.dimension_semantics<parallel>, #tpu.dimension_semantics<parallel>], iteration_bounds = array<i64: 2, 1>, scalar_prefetch = 0 : i64, scratch_operands = 1 : i64, tpu.core_type = #tpu.core_type<tc>, window_params = [{transform_indices = @transform_0, window_bounds = array<i64: 36>}, {transform_indices = @transform_1, window_bounds = array<i64: 4>}, {transform_indices = @transform_2, window_bounds = array<i64: 1, 4, 16, 16>}, {transform_indices = @transform_3, window_bounds = array<i64: 1, 4, 16, 16>}]} {
    %cst = arith.constant 0.000000e+00 : f32
    %0 = vector.broadcast %cst : f32 to vector<32x128xf32>
    %c0 = arith.constant 0 : index
    %c0_0 = arith.constant 0 : index
    %1 = vector.load %arg6[%c0, %c0_0] : memref<32x128xf32, #tpu.memory_space<vmem>>, vector<32x128xf32>
    tpu.vector_store %arg6[%c0, %c0_0], %0 {strides = array<i32>} : memref<32x128xf32, #tpu.memory_space<vmem>>, vector<32x128xf32>,
    %c0_1 = arith.constant 0 : index
    %c0_2 = arith.constant 0 : index
    %c0_3 = arith.constant 0 : index
    %c0_4 = arith.constant 0 : index
    %2 = vector.load %arg4[%c0_1, %c0_2, %c0_3, %c0_4] : memref<1x4x16x16xf32, #tpu.memory_space<vmem>>, vector<1x1x16x16xf32>
    %3 = vector.shape_cast %2 : vector<1x1x16x16xf32> to vector<16x16xf32>
    %c8 = arith.constant 8 : index
    %c0_5 = arith.constant 0 : index
    %4 = vector.load %arg6[%c8, %c0_5] : memref<32x128xf32, #tpu.memory_space<vmem>>, vector<16x16xf32>
    tpu.vector_store %arg6[%c8, %c0_5], %3 {strides = array<i32>} : memref<32x128xf32, #tpu.memory_space<vmem>>, vector<16x16xf32>,
    %c4_i32 = arith.constant 4 : i32
    %5 = arith.muli %arg1, %c4_i32 : i32
    %c0_i32 = arith.constant 0 : i32
    %6 = arith.addi %5, %c0_i32 : i32
    %c9_i32 = arith.constant 9 : i32
    %7 = arith.muli %6, %c9_i32 : i32
    %c0_i32_6 = arith.constant 0 : i32
    %8 = arith.addi %7, %c0_i32_6 : i32
    %9 = arith.index_cast %8 : i32 to index
    %10 = memref.load %arg2[%9] : memref<36xf32, #tpu.memory_space<smem>>
    %c1_i32 = arith.constant 1 : i32
    %11 = arith.addi %7, %c1_i32 : i32
    %12 = arith.index_cast %11 : i32 to index
    %13 = memref.load %arg2[%12] : memref<36xf32, #tpu.memory_space<smem>>
    %c2_i32 = arith.constant 2 : i32
    %14 = arith.addi %7, %c2_i32 : i32
    %15 = arith.index_cast %14 : i32 to index
    %16 = memref.load %arg2[%15] : memref<36xf32, #tpu.memory_space<smem>>
    %c3_i32 = arith.constant 3 : i32
    %17 = arith.addi %7, %c3_i32 : i32
    %18 = arith.index_cast %17 : i32 to index
    %19 = memref.load %arg2[%18] : memref<36xf32, #tpu.memory_space<smem>>
    %c4_i32_7 = arith.constant 4 : i32
    %20 = arith.addi %7, %c4_i32_7 : i32
    %21 = arith.index_cast %20 : i32 to index
    %22 = memref.load %arg2[%21] : memref<36xf32, #tpu.memory_space<smem>>
    %c5_i32 = arith.constant 5 : i32
    %23 = arith.addi %7, %c5_i32 : i32
    %24 = arith.index_cast %23 : i32 to index
    %25 = memref.load %arg2[%24] : memref<36xf32, #tpu.memory_space<smem>>
    %c6_i32 = arith.constant 6 : i32
    %26 = arith.addi %7, %c6_i32 : i32
    %27 = arith.index_cast %26 : i32 to index
    %28 = memref.load %arg2[%27] : memref<36xf32, #tpu.memory_space<smem>>
    %c7_i32 = arith.constant 7 : i32
    %29 = arith.addi %7, %c7_i32 : i32
    %30 = arith.index_cast %29 : i32 to index
    %31 = memref.load %arg2[%30] : memref<36xf32, #tpu.memory_space<smem>>
    %c8_i32 = arith.constant 8 : i32
    %32 = arith.addi %7, %c8_i32 : i32
    %33 = arith.index_cast %32 : i32 to index
    %34 = memref.load %arg2[%33] : memref<36xf32, #tpu.memory_space<smem>>
    %35 = arith.index_cast %6 : i32 to index
    %36 = memref.load %arg3[%35] : memref<4xf32, #tpu.memory_space<smem>>
    %37 = vector.broadcast %36 : f32 to vector<8x128xf32>
    %c7 = arith.constant 7 : index
    %c0_8 = arith.constant 0 : index
    %38 = vector.load %arg6[%c7, %c0_8] : memref<32x128xf32, #tpu.memory_space<vmem>>, vector<8x128xf32>
    %c1_i32_9 = arith.constant 1 : i32
    %39 = tpu.dynamic_rotate %38 by %c1_i32_9 dim 1 : vector<8x128xf32>, i32 -> vector<8x128xf32>
    %40 = vector.broadcast %10 : f32 to vector<8x128xf32>
    %41 = arith.mulf %39, %40 : vector<8x128xf32>
    %42 = arith.addf %37, %41 : vector<8x128xf32>
    %43 = vector.broadcast %13 : f32 to vector<8x128xf32>
    %44 = arith.mulf %38, %43 : vector<8x128xf32>
    %45 = arith.addf %42, %44 : vector<8x128xf32>
    %c127_i32 = arith.constant 127 : i32
    %46 = tpu.dynamic_rotate %38 by %c127_i32 dim 1 : vector<8x128xf32>, i32 -> vector<8x128xf32>
    %47 = vector.broadcast %16 : f32 to vector<8x128xf32>
    %48 = arith.mulf %46, %47 : vector<8x128xf32>
    %49 = arith.addf %45, %48 : vector<8x128xf32>
    %c8_10 = arith.constant 8 : index
    %c0_11 = arith.constant 0 : index
    %50 = vector.load %arg6[%c8_10, %c0_11] : memref<32x128xf32, #tpu.memory_space<vmem>>, vector<8x128xf32>
    %c1_i32_12 = arith.constant 1 : i32
    %51 = tpu.dynamic_rotate %50 by %c1_i32_12 dim 1 : vector<8x128xf32>, i32 -> vector<8x128xf32>
    %52 = vector.broadcast %19 : f32 to vector<8x128xf32>
    %53 = arith.mulf %51, %52 : vector<8x128xf32>
    %54 = arith.addf %49, %53 : vector<8x128xf32>
    %55 = vector.broadcast %22 : f32 to vector<8x128xf32>
    %56 = arith.mulf %50, %55 : vector<8x128xf32>
    %57 = arith.addf %54, %56 : vector<8x128xf32>
    %c127_i32_13 = arith.constant 127 : i32
    %58 = tpu.dynamic_rotate %50 by %c127_i32_13 dim 1 : vector<8x128xf32>, i32 -> vector<8x128xf32>
    %59 = vector.broadcast %25 : f32 to vector<8x128xf32>
    %60 = arith.mulf %58, %59 : vector<8x128xf32>
    %61 = arith.addf %57, %60 : vector<8x128xf32>
    %c9 = arith.constant 9 : index
    %c0_14 = arith.constant 0 : index
    %62 = vector.load %arg6[%c9, %c0_14] : memref<32x128xf32, #tpu.memory_space<vmem>>, vector<8x128xf32>
    %c1_i32_15 = arith.constant 1 : i32
    %63 = tpu.dynamic_rotate %62 by %c1_i32_15 dim 1 : vector<8x128xf32>, i32 -> vector<8x128xf32>
    %64 = vector.broadcast %28 : f32 to vector<8x128xf32>
    %65 = arith.mulf %63, %64 : vector<8x128xf32>
    %66 = arith.addf %61, %65 : vector<8x128xf32>
    %67 = vector.broadcast %31 : f32 to vector<8x128xf32>
    %68 = arith.mulf %62, %67 : vector<8x128xf32>
    %69 = arith.addf %66, %68 : vector<8x128xf32>
    %c127_i32_16 = arith.constant 127 : i32
    %70 = tpu.dynamic_rotate %62 by %c127_i32_16 dim 1 : vector<8x128xf32>, i32 -> vector<8x128xf32>
    %71 = vector.broadcast %34 : f32 to vector<8x128xf32>
    %72 = arith.mulf %70, %71 : vector<8x128xf32>
    %73 = arith.addf %69, %72 : vector<8x128xf32>
    %74 = vector.extract_strided_slice %73 {offsets = [0, 0], sizes = [8, 16], strides = [1, 1]} : vector<8x128xf32> to vector<8x16xf32>
    %c0_17 = arith.constant 0 : index
    %c0_18 = arith.constant 0 : index
    %c0_19 = arith.constant 0 : index
    %c0_20 = arith.constant 0 : index
    %75 = vector.load %arg5[%c0_17, %c0_18, %c0_19, %c0_20] : memref<1x4x16x16xf32, #tpu.memory_space<vmem>>, vector<1x1x8x16xf32>
    %76 = vector.shape_cast %75 : vector<1x1x8x16xf32> to vector<8x16xf32>
    %77 = vector.shape_cast %74 : vector<8x16xf32> to vector<1x1x8x16xf32>
    tpu.vector_store %arg5[%c0_17, %c0_18, %c0_19, %c0_20], %77 {strides = array<i32>} : memref<1x4x16x16xf32, #tpu.memory_space<vmem>>, vector<1x1x8x16xf32>,
    %78 = vector.broadcast %36 : f32 to vector<8x128xf32>
    %c15 = arith.constant 15 : index
    %c0_21 = arith.constant 0 : index
    %79 = vector.load %arg6[%c15, %c0_21] : memref<32x128xf32, #tpu.memory_space<vmem>>, vector<8x128xf32>
    %c1_i32_22 = arith.constant 1 : i32
    %80 = tpu.dynamic_rotate %79 by %c1_i32_22 dim 1 : vector<8x128xf32>, i32 -> vector<8x128xf32>
    %81 = vector.broadcast %10 : f32 to vector<8x128xf32>
    %82 = arith.mulf %80, %81 : vector<8x128xf32>
    %83 = arith.addf %78, %82 : vector<8x128xf32>
    %84 = vector.broadcast %13 : f32 to vector<8x128xf32>
    %85 = arith.mulf %79, %84 : vector<8x128xf32>
    %86 = arith.addf %83, %85 : vector<8x128xf32>
    %c127_i32_23 = arith.constant 127 : i32
    %87 = tpu.dynamic_rotate %79 by %c127_i32_23 dim 1 : vector<8x128xf32>, i32 -> vector<8x128xf32>
    %88 = vector.broadcast %16 : f32 to vector<8x128xf32>
    %89 = arith.mulf %87, %88 : vector<8x128xf32>
    %90 = arith.addf %86, %89 : vector<8x128xf32>
    %c16 = arith.constant 16 : index
    %c0_24 = arith.constant 0 : index
    %91 = vector.load %arg6[%c16, %c0_24] : memref<32x128xf32, #tpu.memory_space<vmem>>, vector<8x128xf32>
    %c1_i32_25 = arith.constant 1 : i32
    %92 = tpu.dynamic_rotate %91 by %c1_i32_25 dim 1 : vector<8x128xf32>, i32 -> vector<8x128xf32>
    %93 = vector.broadcast %19 : f32 to vector<8x128xf32>
    %94 = arith.mulf %92, %93 : vector<8x128xf32>
    %95 = arith.addf %90, %94 : vector<8x128xf32>
    %96 = vector.broadcast %22 : f32 to vector<8x128xf32>
    %97 = arith.mulf %91, %96 : vector<8x128xf32>
    %98 = arith.addf %95, %97 : vector<8x128xf32>
    %c127_i32_26 = arith.constant 127 : i32
    %99 = tpu.dynamic_rotate %91 by %c127_i32_26 dim 1 : vector<8x128xf32>, i32 -> vector<8x128xf32>
    %100 = vector.broadcast %25 : f32 to vector<8x128xf32>
    %101 = arith.mulf %99, %100 : vector<8x128xf32>
    %102 = arith.addf %98, %101 : vector<8x128xf32>
    %c17 = arith.constant 17 : index
    %c0_27 = arith.constant 0 : index
    %103 = vector.load %arg6[%c17, %c0_27] : memref<32x128xf32, #tpu.memory_space<vmem>>, vector<8x128xf32>
    %c1_i32_28 = arith.constant 1 : i32
    %104 = tpu.dynamic_rotate %103 by %c1_i32_28 dim 1 : vector<8x128xf32>, i32 -> vector<8x128xf32>
    %105 = vector.broadcast %28 : f32 to vector<8x128xf32>
    %106 = arith.mulf %104, %105 : vector<8x128xf32>
    %107 = arith.addf %102, %106 : vector<8x128xf32>
    %108 = vector.broadcast %31 : f32 to vector<8x128xf32>
    %109 = arith.mulf %103, %108 : vector<8x128xf32>
    %110 = arith.addf %107, %109 : vector<8x128xf32>
    %c127_i32_29 = arith.constant 127 : i32
    %111 = tpu.dynamic_rotate %103 by %c127_i32_29 dim 1 : vector<8x128xf32>, i32 -> vector<8x128xf32>
    %112 = vector.broadcast %34 : f32 to vector<8x128xf32>
    %113 = arith.mulf %111, %112 : vector<8x128xf32>
    %114 = arith.addf %110, %113 : vector<8x128xf32>
    %115 = vector.extract_strided_slice %114 {offsets = [0, 0], sizes = [8, 16], strides = [1, 1]} : vector<8x128xf32> to vector<8x16xf32>
    %c0_30 = arith.constant 0 : index
    %c0_31 = arith.constant 0 : index
    %c8_32 = arith.constant 8 : index
    %c0_33 = arith.constant 0 : index
    %116 = vector.load %arg5[%c0_30, %c0_31, %c8_32, %c0_33] : memref<1x4x16x16xf32, #tpu.memory_space<vmem>>, vector<1x1x8x16xf32>
    %117 = vector.shape_cast %116 : vector<1x1x8x16xf32> to vector<8x16xf32>
    %118 = vector.shape_cast %115 : vector<8x16xf32> to vector<1x1x8x16xf32>
    tpu.vector_store %arg5[%c0_30, %c0_31, %c8_32, %c0_33], %118 {strides = array<i32>} : memref<1x4x16x16xf32, #tpu.memory_space<vmem>>, vector<1x1x8x16xf32>,
    %c0_34 = arith.constant 0 : index
    %c1 = arith.constant 1 : index
    %c0_35 = arith.constant 0 : index
    %c0_36 = arith.constant 0 : index
    %119 = vector.load %arg4[%c0_34, %c1, %c0_35, %c0_36] : memref<1x4x16x16xf32, #tpu.memory_space<vmem>>, vector<1x1x16x16xf32>
    %120 = vector.shape_cast %119 : vector<1x1x16x16xf32> to vector<16x16xf32>
    %c8_37 = arith.constant 8 : index
    %c0_38 = arith.constant 0 : index
    %121 = vector.load %arg6[%c8_37, %c0_38] : memref<32x128xf32, #tpu.memory_space<vmem>>, vector<16x16xf32>
    tpu.vector_store %arg6[%c8_37, %c0_38], %120 {strides = array<i32>} : memref<32x128xf32, #tpu.memory_space<vmem>>, vector<16x16xf32>,
    %c4_i32_39 = arith.constant 4 : i32
    %122 = arith.muli %arg1, %c4_i32_39 : i32
    %c1_i32_40 = arith.constant 1 : i32
    %123 = arith.addi %122, %c1_i32_40 : i32
    %c9_i32_41 = arith.constant 9 : i32
    %124 = arith.muli %123, %c9_i32_41 : i32
    %c0_i32_42 = arith.constant 0 : i32
    %125 = arith.addi %124, %c0_i32_42 : i32
    %126 = arith.index_cast %125 : i32 to index
    %127 = memref.load %arg2[%126] : memref<36xf32, #tpu.memory_space<smem>>
    %c1_i32_43 = arith.constant 1 : i32
    %128 = arith.addi %124, %c1_i32_43 : i32
    %129 = arith.index_cast %128 : i32 to index
    %130 = memref.load %arg2[%129] : memref<36xf32, #tpu.memory_space<smem>>
    %c2_i32_44 = arith.constant 2 : i32
    %131 = arith.addi %124, %c2_i32_44 : i32
    %132 = arith.index_cast %131 : i32 to index
    %133 = memref.load %arg2[%132] : memref<36xf32, #tpu.memory_space<smem>>
    %c3_i32_45 = arith.constant 3 : i32
    %134 = arith.addi %124, %c3_i32_45 : i32
    %135 = arith.index_cast %134 : i32 to index
    %136 = memref.load %arg2[%135] : memref<36xf32, #tpu.memory_space<smem>>
    %c4_i32_46 = arith.constant 4 : i32
    %137 = arith.addi %124, %c4_i32_46 : i32
    %138 = arith.index_cast %137 : i32 to index
    %139 = memref.load %arg2[%138] : memref<36xf32, #tpu.memory_space<smem>>
    %c5_i32_47 = arith.constant 5 : i32
    %140 = arith.addi %124, %c5_i32_47 : i32
    %141 = arith.index_cast %140 : i32 to index
    %142 = memref.load %arg2[%141] : memref<36xf32, #tpu.memory_space<smem>>
    %c6_i32_48 = arith.constant 6 : i32
    %143 = arith.addi %124, %c6_i32_48 : i32
    %144 = arith.index_cast %143 : i32 to index
    %145 = memref.load %arg2[%144] : memref<36xf32, #tpu.memory_space<smem>>
    %c7_i32_49 = arith.constant 7 : i32
    %146 = arith.addi %124, %c7_i32_49 : i32
    %147 = arith.index_cast %146 : i32 to index
    %148 = memref.load %arg2[%147] : memref<36xf32, #tpu.memory_space<smem>>
    %c8_i32_50 = arith.constant 8 : i32
    %149 = arith.addi %124, %c8_i32_50 : i32
    %150 = arith.index_cast %149 : i32 to index
    %151 = memref.load %arg2[%150] : memref<36xf32, #tpu.memory_space<smem>>
    %152 = arith.index_cast %123 : i32 to index
    %153 = memref.load %arg3[%152] : memref<4xf32, #tpu.memory_space<smem>>
    %154 = vector.broadcast %153 : f32 to vector<8x128xf32>
    %c7_51 = arith.constant 7 : index
    %c0_52 = arith.constant 0 : index
    %155 = vector.load %arg6[%c7_51, %c0_52] : memref<32x128xf32, #tpu.memory_space<vmem>>, vector<8x128xf32>
    %c1_i32_53 = arith.constant 1 : i32
    %156 = tpu.dynamic_rotate %155 by %c1_i32_53 dim 1 : vector<8x128xf32>, i32 -> vector<8x128xf32>
    %157 = vector.broadcast %127 : f32 to vector<8x128xf32>
    %158 = arith.mulf %156, %157 : vector<8x128xf32>
    %159 = arith.addf %154, %158 : vector<8x128xf32>
    %160 = vector.broadcast %130 : f32 to vector<8x128xf32>
    %161 = arith.mulf %155, %160 : vector<8x128xf32>
    %162 = arith.addf %159, %161 : vector<8x128xf32>
    %c127_i32_54 = arith.constant 127 : i32
    %163 = tpu.dynamic_rotate %155 by %c127_i32_54 dim 1 : vector<8x128xf32>, i32 -> vector<8x128xf32>
    %164 = vector.broadcast %133 : f32 to vector<8x128xf32>
    %165 = arith.mulf %163, %164 : vector<8x128xf32>
    %166 = arith.addf %162, %165 : vector<8x128xf32>
    %c8_55 = arith.constant 8 : index
    %c0_56 = arith.constant 0 : index
    %167 = vector.load %arg6[%c8_55, %c0_56] : memref<32x128xf32, #tpu.memory_space<vmem>>, vector<8x128xf32>
    %c1_i32_57 = arith.constant 1 : i32
    %168 = tpu.dynamic_rotate %167 by %c1_i32_57 dim 1 : vector<8x128xf32>, i32 -> vector<8x128xf32>
    %169 = vector.broadcast %136 : f32 to vector<8x128xf32>
    %170 = arith.mulf %168, %169 : vector<8x128xf32>
    %171 = arith.addf %166, %170 : vector<8x128xf32>
    %172 = vector.broadcast %139 : f32 to vector<8x128xf32>
    %173 = arith.mulf %167, %172 : vector<8x128xf32>
    %174 = arith.addf %171, %173 : vector<8x128xf32>
    %c127_i32_58 = arith.constant 127 : i32
    %175 = tpu.dynamic_rotate %167 by %c127_i32_58 dim 1 : vector<8x128xf32>, i32 -> vector<8x128xf32>
    %176 = vector.broadcast %142 : f32 to vector<8x128xf32>
    %177 = arith.mulf %175, %176 : vector<8x128xf32>
    %178 = arith.addf %174, %177 : vector<8x128xf32>
    %c9_59 = arith.constant 9 : index
    %c0_60 = arith.constant 0 : index
    %179 = vector.load %arg6[%c9_59, %c0_60] : memref<32x128xf32, #tpu.memory_space<vmem>>, vector<8x128xf32>
    %c1_i32_61 = arith.constant 1 : i32
    %180 = tpu.dynamic_rotate %179 by %c1_i32_61 dim 1 : vector<8x128xf32>, i32 -> vector<8x128xf32>
    %181 = vector.broadcast %145 : f32 to vector<8x128xf32>
    %182 = arith.mulf %180, %181 : vector<8x128xf32>
    %183 = arith.addf %178, %182 : vector<8x128xf32>
    %184 = vector.broadcast %148 : f32 to vector<8x128xf32>
    %185 = arith.mulf %179, %184 : vector<8x128xf32>
    %186 = arith.addf %183, %185 : vector<8x128xf32>
    %c127_i32_62 = arith.constant 127 : i32
    %187 = tpu.dynamic_rotate %179 by %c127_i32_62 dim 1 : vector<8x128xf32>, i32 -> vector<8x128xf32>
    %188 = vector.broadcast %151 : f32 to vector<8x128xf32>
    %189 = arith.mulf %187, %188 : vector<8x128xf32>
    %190 = arith.addf %186, %189 : vector<8x128xf32>
    %191 = vector.extract_strided_slice %190 {offsets = [0, 0], sizes = [8, 16], strides = [1, 1]} : vector<8x128xf32> to vector<8x16xf32>
    %c0_63 = arith.constant 0 : index
    %c1_64 = arith.constant 1 : index
    %c0_65 = arith.constant 0 : index
    %c0_66 = arith.constant 0 : index
    %192 = vector.load %arg5[%c0_63, %c1_64, %c0_65, %c0_66] : memref<1x4x16x16xf32, #tpu.memory_space<vmem>>, vector<1x1x8x16xf32>
    %193 = vector.shape_cast %192 : vector<1x1x8x16xf32> to vector<8x16xf32>
    %194 = vector.shape_cast %191 : vector<8x16xf32> to vector<1x1x8x16xf32>
    tpu.vector_store %arg5[%c0_63, %c1_64, %c0_65, %c0_66], %194 {strides = array<i32>} : memref<1x4x16x16xf32, #tpu.memory_space<vmem>>, vector<1x1x8x16xf32>,
    %195 = vector.broadcast %153 : f32 to vector<8x128xf32>
    %c15_67 = arith.constant 15 : index
    %c0_68 = arith.constant 0 : index
    %196 = vector.load %arg6[%c15_67, %c0_68] : memref<32x128xf32, #tpu.memory_space<vmem>>, vector<8x128xf32>
    %c1_i32_69 = arith.constant 1 : i32
    %197 = tpu.dynamic_rotate %196 by %c1_i32_69 dim 1 : vector<8x128xf32>, i32 -> vector<8x128xf32>
    %198 = vector.broadcast %127 : f32 to vector<8x128xf32>
    %199 = arith.mulf %197, %198 : vector<8x128xf32>
    %200 = arith.addf %195, %199 : vector<8x128xf32>
    %201 = vector.broadcast %130 : f32 to vector<8x128xf32>
    %202 = arith.mulf %196, %201 : vector<8x128xf32>
    %203 = arith.addf %200, %202 : vector<8x128xf32>
    %c127_i32_70 = arith.constant 127 : i32
    %204 = tpu.dynamic_rotate %196 by %c127_i32_70 dim 1 : vector<8x128xf32>, i32 -> vector<8x128xf32>
    %205 = vector.broadcast %133 : f32 to vector<8x128xf32>
    %206 = arith.mulf %204, %205 : vector<8x128xf32>
    %207 = arith.addf %203, %206 : vector<8x128xf32>
    %c16_71 = arith.constant 16 : index
    %c0_72 = arith.constant 0 : index
    %208 = vector.load %arg6[%c16_71, %c0_72] : memref<32x128xf32, #tpu.memory_space<vmem>>, vector<8x128xf32>
    %c1_i32_73 = arith.constant 1 : i32
    %209 = tpu.dynamic_rotate %208 by %c1_i32_73 dim 1 : vector<8x128xf32>, i32 -> vector<8x128xf32>
    %210 = vector.broadcast %136 : f32 to vector<8x128xf32>
    %211 = arith.mulf %209, %210 : vector<8x128xf32>
    %212 = arith.addf %207, %211 : vector<8x128xf32>
    %213 = vector.broadcast %139 : f32 to vector<8x128xf32>
    %214 = arith.mulf %208, %213 : vector<8x128xf32>
    %215 = arith.addf %212, %214 : vector<8x128xf32>
    %c127_i32_74 = arith.constant 127 : i32
    %216 = tpu.dynamic_rotate %208 by %c127_i32_74 dim 1 : vector<8x128xf32>, i32 -> vector<8x128xf32>
    %217 = vector.broadcast %142 : f32 to vector<8x128xf32>
    %218 = arith.mulf %216, %217 : vector<8x128xf32>
    %219 = arith.addf %215, %218 : vector<8x128xf32>
    %c17_75 = arith.constant 17 : index
    %c0_76 = arith.constant 0 : index
    %220 = vector.load %arg6[%c17_75, %c0_76] : memref<32x128xf32, #tpu.memory_space<vmem>>, vector<8x128xf32>
    %c1_i32_77 = arith.constant 1 : i32
    %221 = tpu.dynamic_rotate %220 by %c1_i32_77 dim 1 : vector<8x128xf32>, i32 -> vector<8x128xf32>
    %222 = vector.broadcast %145 : f32 to vector<8x128xf32>
    %223 = arith.mulf %221, %222 : vector<8x128xf32>
    %224 = arith.addf %219, %223 : vector<8x128xf32>
    %225 = vector.broadcast %148 : f32 to vector<8x128xf32>
    %226 = arith.mulf %220, %225 : vector<8x128xf32>
    %227 = arith.addf %224, %226 : vector<8x128xf32>
    %c127_i32_78 = arith.constant 127 : i32
    %228 = tpu.dynamic_rotate %220 by %c127_i32_78 dim 1 : vector<8x128xf32>, i32 -> vector<8x128xf32>
    %229 = vector.broadcast %151 : f32 to vector<8x128xf32>
    %230 = arith.mulf %228, %229 : vector<8x128xf32>
    %231 = arith.addf %227, %230 : vector<8x128xf32>
    %232 = vector.extract_strided_slice %231 {offsets = [0, 0], sizes = [8, 16], strides = [1, 1]} : vector<8x128xf32> to vector<8x16xf32>
    %c0_79 = arith.constant 0 : index
    %c1_80 = arith.constant 1 : index
    %c8_81 = arith.constant 8 : index
    %c0_82 = arith.constant 0 : index
    %233 = vector.load %arg5[%c0_79, %c1_80, %c8_81, %c0_82] : memref<1x4x16x16xf32, #tpu.memory_space<vmem>>, vector<1x1x8x16xf32>
    %234 = vector.shape_cast %233 : vector<1x1x8x16xf32> to vector<8x16xf32>
    %235 = vector.shape_cast %232 : vector<8x16xf32> to vector<1x1x8x16xf32>
    tpu.vector_store %arg5[%c0_79, %c1_80, %c8_81, %c0_82], %235 {strides = array<i32>} : memref<1x4x16x16xf32, #tpu.memory_space<vmem>>, vector<1x1x8x16xf32>,
    %c0_83 = arith.constant 0 : index
    %c2 = arith.constant 2 : index
    %c0_84 = arith.constant 0 : index
    %c0_85 = arith.constant 0 : index
    %236 = vector.load %arg4[%c0_83, %c2, %c0_84, %c0_85] : memref<1x4x16x16xf32, #tpu.memory_space<vmem>>, vector<1x1x16x16xf32>
    %237 = vector.shape_cast %236 : vector<1x1x16x16xf32> to vector<16x16xf32>
    %c8_86 = arith.constant 8 : index
    %c0_87 = arith.constant 0 : index
    %238 = vector.load %arg6[%c8_86, %c0_87] : memref<32x128xf32, #tpu.memory_space<vmem>>, vector<16x16xf32>
    tpu.vector_store %arg6[%c8_86, %c0_87], %237 {strides = array<i32>} : memref<32x128xf32, #tpu.memory_space<vmem>>, vector<16x16xf32>,
    %c4_i32_88 = arith.constant 4 : i32
    %239 = arith.muli %arg1, %c4_i32_88 : i32
    %c2_i32_89 = arith.constant 2 : i32
    %240 = arith.addi %239, %c2_i32_89 : i32
    %c9_i32_90 = arith.constant 9 : i32
    %241 = arith.muli %240, %c9_i32_90 : i32
    %c0_i32_91 = arith.constant 0 : i32
    %242 = arith.addi %241, %c0_i32_91 : i32
    %243 = arith.index_cast %242 : i32 to index
    %244 = memref.load %arg2[%243] : memref<36xf32, #tpu.memory_space<smem>>
    %c1_i32_92 = arith.constant 1 : i32
    %245 = arith.addi %241, %c1_i32_92 : i32
    %246 = arith.index_cast %245 : i32 to index
    %247 = memref.load %arg2[%246] : memref<36xf32, #tpu.memory_space<smem>>
    %c2_i32_93 = arith.constant 2 : i32
    %248 = arith.addi %241, %c2_i32_93 : i32
    %249 = arith.index_cast %248 : i32 to index
    %250 = memref.load %arg2[%249] : memref<36xf32, #tpu.memory_space<smem>>
    %c3_i32_94 = arith.constant 3 : i32
    %251 = arith.addi %241, %c3_i32_94 : i32
    %252 = arith.index_cast %251 : i32 to index
    %253 = memref.load %arg2[%252] : memref<36xf32, #tpu.memory_space<smem>>
    %c4_i32_95 = arith.constant 4 : i32
    %254 = arith.addi %241, %c4_i32_95 : i32
    %255 = arith.index_cast %254 : i32 to index
    %256 = memref.load %arg2[%255] : memref<36xf32, #tpu.memory_space<smem>>
    %c5_i32_96 = arith.constant 5 : i32
    %257 = arith.addi %241, %c5_i32_96 : i32
    %258 = arith.index_cast %257 : i32 to index
    %259 = memref.load %arg2[%258] : memref<36xf32, #tpu.memory_space<smem>>
    %c6_i32_97 = arith.constant 6 : i32
    %260 = arith.addi %241, %c6_i32_97 : i32
    %261 = arith.index_cast %260 : i32 to index
    %262 = memref.load %arg2[%261] : memref<36xf32, #tpu.memory_space<smem>>
    %c7_i32_98 = arith.constant 7 : i32
    %263 = arith.addi %241, %c7_i32_98 : i32
    %264 = arith.index_cast %263 : i32 to index
    %265 = memref.load %arg2[%264] : memref<36xf32, #tpu.memory_space<smem>>
    %c8_i32_99 = arith.constant 8 : i32
    %266 = arith.addi %241, %c8_i32_99 : i32
    %267 = arith.index_cast %266 : i32 to index
    %268 = memref.load %arg2[%267] : memref<36xf32, #tpu.memory_space<smem>>
    %269 = arith.index_cast %240 : i32 to index
    %270 = memref.load %arg3[%269] : memref<4xf32, #tpu.memory_space<smem>>
    %271 = vector.broadcast %270 : f32 to vector<8x128xf32>
    %c7_100 = arith.constant 7 : index
    %c0_101 = arith.constant 0 : index
    %272 = vector.load %arg6[%c7_100, %c0_101] : memref<32x128xf32, #tpu.memory_space<vmem>>, vector<8x128xf32>
    %c1_i32_102 = arith.constant 1 : i32
    %273 = tpu.dynamic_rotate %272 by %c1_i32_102 dim 1 : vector<8x128xf32>, i32 -> vector<8x128xf32>
    %274 = vector.broadcast %244 : f32 to vector<8x128xf32>
    %275 = arith.mulf %273, %274 : vector<8x128xf32>
    %276 = arith.addf %271, %275 : vector<8x128xf32>
    %277 = vector.broadcast %247 : f32 to vector<8x128xf32>
    %278 = arith.mulf %272, %277 : vector<8x128xf32>
    %279 = arith.addf %276, %278 : vector<8x128xf32>
    %c127_i32_103 = arith.constant 127 : i32
    %280 = tpu.dynamic_rotate %272 by %c127_i32_103 dim 1 : vector<8x128xf32>, i32 -> vector<8x128xf32>
    %281 = vector.broadcast %250 : f32 to vector<8x128xf32>
    %282 = arith.mulf %280, %281 : vector<8x128xf32>
    %283 = arith.addf %279, %282 : vector<8x128xf32>
    %c8_104 = arith.constant 8 : index
    %c0_105 = arith.constant 0 : index
    %284 = vector.load %arg6[%c8_104, %c0_105] : memref<32x128xf32, #tpu.memory_space<vmem>>, vector<8x128xf32>
    %c1_i32_106 = arith.constant 1 : i32
    %285 = tpu.dynamic_rotate %284 by %c1_i32_106 dim 1 : vector<8x128xf32>, i32 -> vector<8x128xf32>
    %286 = vector.broadcast %253 : f32 to vector<8x128xf32>
    %287 = arith.mulf %285, %286 : vector<8x128xf32>
    %288 = arith.addf %283, %287 : vector<8x128xf32>
    %289 = vector.broadcast %256 : f32 to vector<8x128xf32>
    %290 = arith.mulf %284, %289 : vector<8x128xf32>
    %291 = arith.addf %288, %290 : vector<8x128xf32>
    %c127_i32_107 = arith.constant 127 : i32
    %292 = tpu.dynamic_rotate %284 by %c127_i32_107 dim 1 : vector<8x128xf32>, i32 -> vector<8x128xf32>
    %293 = vector.broadcast %259 : f32 to vector<8x128xf32>
    %294 = arith.mulf %292, %293 : vector<8x128xf32>
    %295 = arith.addf %291, %294 : vector<8x128xf32>
    %c9_108 = arith.constant 9 : index
    %c0_109 = arith.constant 0 : index
    %296 = vector.load %arg6[%c9_108, %c0_109] : memref<32x128xf32, #tpu.memory_space<vmem>>, vector<8x128xf32>
    %c1_i32_110 = arith.constant 1 : i32
    %297 = tpu.dynamic_rotate %296 by %c1_i32_110 dim 1 : vector<8x128xf32>, i32 -> vector<8x128xf32>
    %298 = vector.broadcast %262 : f32 to vector<8x128xf32>
    %299 = arith.mulf %297, %298 : vector<8x128xf32>
    %300 = arith.addf %295, %299 : vector<8x128xf32>
    %301 = vector.broadcast %265 : f32 to vector<8x128xf32>
    %302 = arith.mulf %296, %301 : vector<8x128xf32>
    %303 = arith.addf %300, %302 : vector<8x128xf32>
    %c127_i32_111 = arith.constant 127 : i32
    %304 = tpu.dynamic_rotate %296 by %c127_i32_111 dim 1 : vector<8x128xf32>, i32 -> vector<8x128xf32>
    %305 = vector.broadcast %268 : f32 to vector<8x128xf32>
    %306 = arith.mulf %304, %305 : vector<8x128xf32>
    %307 = arith.addf %303, %306 : vector<8x128xf32>
    %308 = vector.extract_strided_slice %307 {offsets = [0, 0], sizes = [8, 16], strides = [1, 1]} : vector<8x128xf32> to vector<8x16xf32>
    %c0_112 = arith.constant 0 : index
    %c2_113 = arith.constant 2 : index
    %c0_114 = arith.constant 0 : index
    %c0_115 = arith.constant 0 : index
    %309 = vector.load %arg5[%c0_112, %c2_113, %c0_114, %c0_115] : memref<1x4x16x16xf32, #tpu.memory_space<vmem>>, vector<1x1x8x16xf32>
    %310 = vector.shape_cast %309 : vector<1x1x8x16xf32> to vector<8x16xf32>
    %311 = vector.shape_cast %308 : vector<8x16xf32> to vector<1x1x8x16xf32>
    tpu.vector_store %arg5[%c0_112, %c2_113, %c0_114, %c0_115], %311 {strides = array<i32>} : memref<1x4x16x16xf32, #tpu.memory_space<vmem>>, vector<1x1x8x16xf32>,
    %312 = vector.broadcast %270 : f32 to vector<8x128xf32>
    %c15_116 = arith.constant 15 : index
    %c0_117 = arith.constant 0 : index
    %313 = vector.load %arg6[%c15_116, %c0_117] : memref<32x128xf32, #tpu.memory_space<vmem>>, vector<8x128xf32>
    %c1_i32_118 = arith.constant 1 : i32
    %314 = tpu.dynamic_rotate %313 by %c1_i32_118 dim 1 : vector<8x128xf32>, i32 -> vector<8x128xf32>
    %315 = vector.broadcast %244 : f32 to vector<8x128xf32>
    %316 = arith.mulf %314, %315 : vector<8x128xf32>
    %317 = arith.addf %312, %316 : vector<8x128xf32>
    %318 = vector.broadcast %247 : f32 to vector<8x128xf32>
    %319 = arith.mulf %313, %318 : vector<8x128xf32>
    %320 = arith.addf %317, %319 : vector<8x128xf32>
    %c127_i32_119 = arith.constant 127 : i32
    %321 = tpu.dynamic_rotate %313 by %c127_i32_119 dim 1 : vector<8x128xf32>, i32 -> vector<8x128xf32>
    %322 = vector.broadcast %250 : f32 to vector<8x128xf32>
    %323 = arith.mulf %321, %322 : vector<8x128xf32>
    %324 = arith.addf %320, %323 : vector<8x128xf32>
    %c16_120 = arith.constant 16 : index
    %c0_121 = arith.constant 0 : index
    %325 = vector.load %arg6[%c16_120, %c0_121] : memref<32x128xf32, #tpu.memory_space<vmem>>, vector<8x128xf32>
    %c1_i32_122 = arith.constant 1 : i32
    %326 = tpu.dynamic_rotate %325 by %c1_i32_122 dim 1 : vector<8x128xf32>, i32 -> vector<8x128xf32>
    %327 = vector.broadcast %253 : f32 to vector<8x128xf32>
    %328 = arith.mulf %326, %327 : vector<8x128xf32>
    %329 = arith.addf %324, %328 : vector<8x128xf32>
    %330 = vector.broadcast %256 : f32 to vector<8x128xf32>
    %331 = arith.mulf %325, %330 : vector<8x128xf32>
    %332 = arith.addf %329, %331 : vector<8x128xf32>
    %c127_i32_123 = arith.constant 127 : i32
    %333 = tpu.dynamic_rotate %325 by %c127_i32_123 dim 1 : vector<8x128xf32>, i32 -> vector<8x128xf32>
    %334 = vector.broadcast %259 : f32 to vector<8x128xf32>
    %335 = arith.mulf %333, %334 : vector<8x128xf32>
    %336 = arith.addf %332, %335 : vector<8x128xf32>
    %c17_124 = arith.constant 17 : index
    %c0_125 = arith.constant 0 : index
    %337 = vector.load %arg6[%c17_124, %c0_125] : memref<32x128xf32, #tpu.memory_space<vmem>>, vector<8x128xf32>
    %c1_i32_126 = arith.constant 1 : i32
    %338 = tpu.dynamic_rotate %337 by %c1_i32_126 dim 1 : vector<8x128xf32>, i32 -> vector<8x128xf32>
    %339 = vector.broadcast %262 : f32 to vector<8x128xf32>
    %340 = arith.mulf %338, %339 : vector<8x128xf32>
    %341 = arith.addf %336, %340 : vector<8x128xf32>
    %342 = vector.broadcast %265 : f32 to vector<8x128xf32>
    %343 = arith.mulf %337, %342 : vector<8x128xf32>
    %344 = arith.addf %341, %343 : vector<8x128xf32>
    %c127_i32_127 = arith.constant 127 : i32
    %345 = tpu.dynamic_rotate %337 by %c127_i32_127 dim 1 : vector<8x128xf32>, i32 -> vector<8x128xf32>
    %346 = vector.broadcast %268 : f32 to vector<8x128xf32>
    %347 = arith.mulf %345, %346 : vector<8x128xf32>
    %348 = arith.addf %344, %347 : vector<8x128xf32>
    %349 = vector.extract_strided_slice %348 {offsets = [0, 0], sizes = [8, 16], strides = [1, 1]} : vector<8x128xf32> to vector<8x16xf32>
    %c0_128 = arith.constant 0 : index
    %c2_129 = arith.constant 2 : index
    %c8_130 = arith.constant 8 : index
    %c0_131 = arith.constant 0 : index
    %350 = vector.load %arg5[%c0_128, %c2_129, %c8_130, %c0_131] : memref<1x4x16x16xf32, #tpu.memory_space<vmem>>, vector<1x1x8x16xf32>
    %351 = vector.shape_cast %350 : vector<1x1x8x16xf32> to vector<8x16xf32>
    %352 = vector.shape_cast %349 : vector<8x16xf32> to vector<1x1x8x16xf32>
    tpu.vector_store %arg5[%c0_128, %c2_129, %c8_130, %c0_131], %352 {strides = array<i32>} : memref<1x4x16x16xf32, #tpu.memory_space<vmem>>, vector<1x1x8x16xf32>,
    %c0_132 = arith.constant 0 : index
    %c3 = arith.constant 3 : index
    %c0_133 = arith.constant 0 : index
    %c0_134 = arith.constant 0 : index
    %353 = vector.load %arg4[%c0_132, %c3, %c0_133, %c0_134] : memref<1x4x16x16xf32, #tpu.memory_space<vmem>>, vector<1x1x16x16xf32>
    %354 = vector.shape_cast %353 : vector<1x1x16x16xf32> to vector<16x16xf32>
    %c8_135 = arith.constant 8 : index
    %c0_136 = arith.constant 0 : index
    %355 = vector.load %arg6[%c8_135, %c0_136] : memref<32x128xf32, #tpu.memory_space<vmem>>, vector<16x16xf32>
    tpu.vector_store %arg6[%c8_135, %c0_136], %354 {strides = array<i32>} : memref<32x128xf32, #tpu.memory_space<vmem>>, vector<16x16xf32>,
    %c4_i32_137 = arith.constant 4 : i32
    %356 = arith.muli %arg1, %c4_i32_137 : i32
    %c3_i32_138 = arith.constant 3 : i32
    %357 = arith.addi %356, %c3_i32_138 : i32
    %c9_i32_139 = arith.constant 9 : i32
    %358 = arith.muli %357, %c9_i32_139 : i32
    %c0_i32_140 = arith.constant 0 : i32
    %359 = arith.addi %358, %c0_i32_140 : i32
    %360 = arith.index_cast %359 : i32 to index
    %361 = memref.load %arg2[%360] : memref<36xf32, #tpu.memory_space<smem>>
    %c1_i32_141 = arith.constant 1 : i32
    %362 = arith.addi %358, %c1_i32_141 : i32
    %363 = arith.index_cast %362 : i32 to index
    %364 = memref.load %arg2[%363] : memref<36xf32, #tpu.memory_space<smem>>
    %c2_i32_142 = arith.constant 2 : i32
    %365 = arith.addi %358, %c2_i32_142 : i32
    %366 = arith.index_cast %365 : i32 to index
    %367 = memref.load %arg2[%366] : memref<36xf32, #tpu.memory_space<smem>>
    %c3_i32_143 = arith.constant 3 : i32
    %368 = arith.addi %358, %c3_i32_143 : i32
    %369 = arith.index_cast %368 : i32 to index
    %370 = memref.load %arg2[%369] : memref<36xf32, #tpu.memory_space<smem>>
    %c4_i32_144 = arith.constant 4 : i32
    %371 = arith.addi %358, %c4_i32_144 : i32
    %372 = arith.index_cast %371 : i32 to index
    %373 = memref.load %arg2[%372] : memref<36xf32, #tpu.memory_space<smem>>
    %c5_i32_145 = arith.constant 5 : i32
    %374 = arith.addi %358, %c5_i32_145 : i32
    %375 = arith.index_cast %374 : i32 to index
    %376 = memref.load %arg2[%375] : memref<36xf32, #tpu.memory_space<smem>>
    %c6_i32_146 = arith.constant 6 : i32
    %377 = arith.addi %358, %c6_i32_146 : i32
    %378 = arith.index_cast %377 : i32 to index
    %379 = memref.load %arg2[%378] : memref<36xf32, #tpu.memory_space<smem>>
    %c7_i32_147 = arith.constant 7 : i32
    %380 = arith.addi %358, %c7_i32_147 : i32
    %381 = arith.index_cast %380 : i32 to index
    %382 = memref.load %arg2[%381] : memref<36xf32, #tpu.memory_space<smem>>
    %c8_i32_148 = arith.constant 8 : i32
    %383 = arith.addi %358, %c8_i32_148 : i32
    %384 = arith.index_cast %383 : i32 to index
    %385 = memref.load %arg2[%384] : memref<36xf32, #tpu.memory_space<smem>>
    %386 = arith.index_cast %357 : i32 to index
    %387 = memref.load %arg3[%386] : memref<4xf32, #tpu.memory_space<smem>>
    %388 = vector.broadcast %387 : f32 to vector<8x128xf32>
    %c7_149 = arith.constant 7 : index
    %c0_150 = arith.constant 0 : index
    %389 = vector.load %arg6[%c7_149, %c0_150] : memref<32x128xf32, #tpu.memory_space<vmem>>, vector<8x128xf32>
    %c1_i32_151 = arith.constant 1 : i32
    %390 = tpu.dynamic_rotate %389 by %c1_i32_151 dim 1 : vector<8x128xf32>, i32 -> vector<8x128xf32>
    %391 = vector.broadcast %361 : f32 to vector<8x128xf32>
    %392 = arith.mulf %390, %391 : vector<8x128xf32>
    %393 = arith.addf %388, %392 : vector<8x128xf32>
    %394 = vector.broadcast %364 : f32 to vector<8x128xf32>
    %395 = arith.mulf %389, %394 : vector<8x128xf32>
    %396 = arith.addf %393, %395 : vector<8x128xf32>
    %c127_i32_152 = arith.constant 127 : i32
    %397 = tpu.dynamic_rotate %389 by %c127_i32_152 dim 1 : vector<8x128xf32>, i32 -> vector<8x128xf32>
    %398 = vector.broadcast %367 : f32 to vector<8x128xf32>
    %399 = arith.mulf %397, %398 : vector<8x128xf32>
    %400 = arith.addf %396, %399 : vector<8x128xf32>
    %c8_153 = arith.constant 8 : index
    %c0_154 = arith.constant 0 : index
    %401 = vector.load %arg6[%c8_153, %c0_154] : memref<32x128xf32, #tpu.memory_space<vmem>>, vector<8x128xf32>
    %c1_i32_155 = arith.constant 1 : i32
    %402 = tpu.dynamic_rotate %401 by %c1_i32_155 dim 1 : vector<8x128xf32>, i32 -> vector<8x128xf32>
    %403 = vector.broadcast %370 : f32 to vector<8x128xf32>
    %404 = arith.mulf %402, %403 : vector<8x128xf32>
    %405 = arith.addf %400, %404 : vector<8x128xf32>
    %406 = vector.broadcast %373 : f32 to vector<8x128xf32>
    %407 = arith.mulf %401, %406 : vector<8x128xf32>
    %408 = arith.addf %405, %407 : vector<8x128xf32>
    %c127_i32_156 = arith.constant 127 : i32
    %409 = tpu.dynamic_rotate %401 by %c127_i32_156 dim 1 : vector<8x128xf32>, i32 -> vector<8x128xf32>
    %410 = vector.broadcast %376 : f32 to vector<8x128xf32>
    %411 = arith.mulf %409, %410 : vector<8x128xf32>
    %412 = arith.addf %408, %411 : vector<8x128xf32>
    %c9_157 = arith.constant 9 : index
    %c0_158 = arith.constant 0 : index
    %413 = vector.load %arg6[%c9_157, %c0_158] : memref<32x128xf32, #tpu.memory_space<vmem>>, vector<8x128xf32>
    %c1_i32_159 = arith.constant 1 : i32
    %414 = tpu.dynamic_rotate %413 by %c1_i32_159 dim 1 : vector<8x128xf32>, i32 -> vector<8x128xf32>
    %415 = vector.broadcast %379 : f32 to vector<8x128xf32>
    %416 = arith.mulf %414, %415 : vector<8x128xf32>
    %417 = arith.addf %412, %416 : vector<8x128xf32>
    %418 = vector.broadcast %382 : f32 to vector<8x128xf32>
    %419 = arith.mulf %413, %418 : vector<8x128xf32>
    %420 = arith.addf %417, %419 : vector<8x128xf32>
    %c127_i32_160 = arith.constant 127 : i32
    %421 = tpu.dynamic_rotate %413 by %c127_i32_160 dim 1 : vector<8x128xf32>, i32 -> vector<8x128xf32>
    %422 = vector.broadcast %385 : f32 to vector<8x128xf32>
    %423 = arith.mulf %421, %422 : vector<8x128xf32>
    %424 = arith.addf %420, %423 : vector<8x128xf32>
    %425 = vector.extract_strided_slice %424 {offsets = [0, 0], sizes = [8, 16], strides = [1, 1]} : vector<8x128xf32> to vector<8x16xf32>
    %c0_161 = arith.constant 0 : index
    %c3_162 = arith.constant 3 : index
    %c0_163 = arith.constant 0 : index
    %c0_164 = arith.constant 0 : index
    %426 = vector.load %arg5[%c0_161, %c3_162, %c0_163, %c0_164] : memref<1x4x16x16xf32, #tpu.memory_space<vmem>>, vector<1x1x8x16xf32>
    %427 = vector.shape_cast %426 : vector<1x1x8x16xf32> to vector<8x16xf32>
    %428 = vector.shape_cast %425 : vector<8x16xf32> to vector<1x1x8x16xf32>
    tpu.vector_store %arg5[%c0_161, %c3_162, %c0_163, %c0_164], %428 {strides = array<i32>} : memref<1x4x16x16xf32, #tpu.memory_space<vmem>>, vector<1x1x8x16xf32>,
    %429 = vector.broadcast %387 : f32 to vector<8x128xf32>
    %c15_165 = arith.constant 15 : index
    %c0_166 = arith.constant 0 : index
    %430 = vector.load %arg6[%c15_165, %c0_166] : memref<32x128xf32, #tpu.memory_space<vmem>>, vector<8x128xf32>
    %c1_i32_167 = arith.constant 1 : i32
    %431 = tpu.dynamic_rotate %430 by %c1_i32_167 dim 1 : vector<8x128xf32>, i32 -> vector<8x128xf32>
    %432 = vector.broadcast %361 : f32 to vector<8x128xf32>
    %433 = arith.mulf %431, %432 : vector<8x128xf32>
    %434 = arith.addf %429, %433 : vector<8x128xf32>
    %435 = vector.broadcast %364 : f32 to vector<8x128xf32>
    %436 = arith.mulf %430, %435 : vector<8x128xf32>
    %437 = arith.addf %434, %436 : vector<8x128xf32>
    %c127_i32_168 = arith.constant 127 : i32
    %438 = tpu.dynamic_rotate %430 by %c127_i32_168 dim 1 : vector<8x128xf32>, i32 -> vector<8x128xf32>
    %439 = vector.broadcast %367 : f32 to vector<8x128xf32>
    %440 = arith.mulf %438, %439 : vector<8x128xf32>
    %441 = arith.addf %437, %440 : vector<8x128xf32>
    %c16_169 = arith.constant 16 : index
    %c0_170 = arith.constant 0 : index
    %442 = vector.load %arg6[%c16_169, %c0_170] : memref<32x128xf32, #tpu.memory_space<vmem>>, vector<8x128xf32>
    %c1_i32_171 = arith.constant 1 : i32
    %443 = tpu.dynamic_rotate %442 by %c1_i32_171 dim 1 : vector<8x128xf32>, i32 -> vector<8x128xf32>
    %444 = vector.broadcast %370 : f32 to vector<8x128xf32>
    %445 = arith.mulf %443, %444 : vector<8x128xf32>
    %446 = arith.addf %441, %445 : vector<8x128xf32>
    %447 = vector.broadcast %373 : f32 to vector<8x128xf32>
    %448 = arith.mulf %442, %447 : vector<8x128xf32>
    %449 = arith.addf %446, %448 : vector<8x128xf32>
    %c127_i32_172 = arith.constant 127 : i32
    %450 = tpu.dynamic_rotate %442 by %c127_i32_172 dim 1 : vector<8x128xf32>, i32 -> vector<8x128xf32>
    %451 = vector.broadcast %376 : f32 to vector<8x128xf32>
    %452 = arith.mulf %450, %451 : vector<8x128xf32>
    %453 = arith.addf %449, %452 : vector<8x128xf32>
    %c17_173 = arith.constant 17 : index
    %c0_174 = arith.constant 0 : index
    %454 = vector.load %arg6[%c17_173, %c0_174] : memref<32x128xf32, #tpu.memory_space<vmem>>, vector<8x128xf32>
    %c1_i32_175 = arith.constant 1 : i32
    %455 = tpu.dynamic_rotate %454 by %c1_i32_175 dim 1 : vector<8x128xf32>, i32 -> vector<8x128xf32>
    %456 = vector.broadcast %379 : f32 to vector<8x128xf32>
    %457 = arith.mulf %455, %456 : vector<8x128xf32>
    %458 = arith.addf %453, %457 : vector<8x128xf32>
    %459 = vector.broadcast %382 : f32 to vector<8x128xf32>
    %460 = arith.mulf %454, %459 : vector<8x128xf32>
    %461 = arith.addf %458, %460 : vector<8x128xf32>
    %c127_i32_176 = arith.constant 127 : i32
    %462 = tpu.dynamic_rotate %454 by %c127_i32_176 dim 1 : vector<8x128xf32>, i32 -> vector<8x128xf32>
    %463 = vector.broadcast %385 : f32 to vector<8x128xf32>
    %464 = arith.mulf %462, %463 : vector<8x128xf32>
    %465 = arith.addf %461, %464 : vector<8x128xf32>
    %466 = vector.extract_strided_slice %465 {offsets = [0, 0], sizes = [8, 16], strides = [1, 1]} : vector<8x128xf32> to vector<8x16xf32>
    %c0_177 = arith.constant 0 : index
    %c3_178 = arith.constant 3 : index
    %c8_179 = arith.constant 8 : index
    %c0_180 = arith.constant 0 : index
    %467 = vector.load %arg5[%c0_177, %c3_178, %c8_179, %c0_180] : memref<1x4x16x16xf32, #tpu.memory_space<vmem>>, vector<1x1x8x16xf32>
    %468 = vector.shape_cast %467 : vector<1x1x8x16xf32> to vector<8x16xf32>
    %469 = vector.shape_cast %466 : vector<8x16xf32> to vector<1x1x8x16xf32>
    tpu.vector_store %arg5[%c0_177, %c3_178, %c8_179, %c0_180], %469 {strides = array<i32>} : memref<1x4x16x16xf32, #tpu.memory_space<vmem>>, vector<1x1x8x16xf32>,
    return
  }
  func.func @transform_0(%arg0: i32, %arg1: i32) -> i32 {
    %c0_i32 = arith.constant 0 : i32
    %c0_i32_0 = arith.constant 0 : i32
    return %c0_i32 : i32
  }
  func.func @transform_1(%arg0: i32, %arg1: i32) -> i32 {
    %c0_i32 = arith.constant 0 : i32
    %c0_i32_0 = arith.constant 0 : i32
    return %c0_i32 : i32
  }
  func.func @transform_2(%arg0: i32, %arg1: i32) -> (i32, i32, i32, i32) {
    %c0_i32 = arith.constant 0 : i32
    %c0_i32_0 = arith.constant 0 : i32
    %c0_i32_1 = arith.constant 0 : i32
    return %arg0, %arg1, %c0_i32, %c0_i32_0 : i32, i32, i32, i32
  }
  func.func @transform_3(%arg0: i32, %arg1: i32) -> (i32, i32, i32, i32) {
    %c0_i32 = arith.constant 0 : i32
    %c0_i32_0 = arith.constant 0 : i32
    %c0_i32_1 = arith.constant 0 : i32
    return %arg0, %arg1, %c0_i32, %c0_i32_0 : i32, i32, i32, i32
  }
}

</mosaic_0001>

<llo_original>
// kernel: tpu_custom_call.1
$region0: #{tpu_custom_call.1}
  #allocation0 [shape = 'u32[]', space=smem, size = 0x4, offset = 0x4, fixed_abs, tag = 'smem constant byte address 0x4 - core index']
  #allocation1 [shape = 'u32[144,128]{1,0:T(1,128)}', space=vmem, size = 0x12000, scoped, tag = 'internal scratch']
  #allocation2 [shape = 'f32[32,128]{1,0:T(8,128)}', space=vmem, size = 0x4000, scoped, tag = 'scratch operand']
  %s0 = inlined_call_operand.hbm [shape: f32[36], index: 0, kind: input, shape index: {}]
  %s1 = inlined_call_operand.vmem [shape: f32[4], index: 1, kind: input, shape index: {}]
  %s2 = inlined_call_operand.hbm [shape: f32[2,4,16,16], index: 2, kind: input, shape index: {}]
  %s3 = inlined_call_operand.hbm [shape: f32[2,4,16,16], index: 3, kind: output, shape index: {}]
  %s4 = sld [smem:[#allocation0]]
  $region57: #{tpu_custom_call.1} parent=0
    _
  %s6 = ssub.s32 1, %s4
  %s7 = scalar_select 0, %s6, %s4
  $region1: #{tpu_custom_call.1} parent=0
    #allocation3 [shape = 'u8[512]{0}', space=smem, size = 0x200, scoped, tag = 'input window, operand 0, single buffered']
    #allocation4 [shape = 's32[2]{0}', space=sflag, size = 0x8, scoped, tag = 'scoped memory for tpu_custom_call.1']
    #allocation5 [shape = 's32[2]{0}', space=sflag, size = 0x8, scoped, tag = 'scoped memory for tpu_custom_call.1']
    #allocation6 [shape = 's32[2]{0}', space=sflag, size = 0x8, scoped, tag = 'scoped memory for tpu_custom_call.1']
    #allocation7 [shape = 's32[2]{0}', space=sflag, size = 0x8, scoped, tag = 'scoped memory for tpu_custom_call.1']
    #allocation8 [shape = 'u8[512]{0}', space=smem, size = 0x200, scoped, tag = 'input window, operand 1, single buffered']
    #allocation9 [shape = 'u8[65536]{0}', space=vmem, size = 0x10000, scoped, tag = 'input window, operand 2']
    #allocation10 [shape = 'u8[65536]{0}', space=vmem, size = 0x10000, scoped, tag = 'output window, operand 0']
    %8 = vsyncpa [#allocation6], 0
    %9 = vsyncpa [#allocation7], 0
    %10 = vsyncpa [#allocation4], 0
    %s11 = scalar_lea.sflag [#allocation4], 1
    %12 = vsyncpa %s11, 0
    %13 = vsyncpa [#allocation5], 0
    %s14 = scalar_lea.sflag [#allocation5], 1
    %15 = vsyncpa %s14, 0
    loop: start=0, step=1, limit=4
    $region2: #{tpu_custom_call.1} parent=1 // loop_pre_header
      _
    $region3: #{tpu_custom_call.1} parent=1 // loop_header
      %s17 = sphi 0, %s21
      %p18 = scmp.ge.s32.totalorder %s17, 4
      %s24 = sphi 0, %s36
      %s25 = sphi 0, %s32
      %s26 = sphi 0, %s24
      %s27 = sphi 0, %s25
      %s28 = sphi 0, %s26
      %s29 = sphi 0, %s27
      %s37 = sphi 0, %s37
      %s39 = sphi 0, %s37
      %s40 = sphi 0, %s39
      %s54 = sphi 0, %s40
      %s58 = sphi 0, %s58
      %s60 = sphi 0, %s58
      %s61 = sphi 0, %s60
      %s75 = sphi 0, %s61
      %s83 = sphi 0, %s85
      %s86 = sphi 0, %s83
      %s87 = sphi 0, %s86
      %s103 = sphi 0, %s87
      %s111 = sphi 0, %s113
      %s114 = sphi 0, %s111
      %s115 = sphi 0, %s114
      %s131 = sphi 0, %s115
    $region4: #{tpu_custom_call.1} parent=1 // loop_header_branch
      %20 = sbr.rel (%p18) target = $region8
    $region5: #{tpu_custom_call.1} parent=1 // loop_body
      %s22 = ssub.s32 %s17, 1
      %s23 = ssub.s32 %s17, 2
      %s30 = sadd.s32 1, %s25
      %p31 = scmp.ge.s32.totalorder %s30, 1
      %s32 = scalar_select %p31, 0, %s30
      %s33 = sadd.s32 1, %s24
      %s34 = scalar_select %p31, %s33, %s24
      %p35 = scmp.ge.s32.totalorder %s34, 2
      %s36 = scalar_select %p35, 0, %s34
      %s38 = sadd.s32 %s37, 1
      %p41 = scmp.eq.s32.totalorder %s17, 1
      %p42 = scmp.ne.s32.totalorder %s37, %s39
      %p43 = scmp.eq.s32.totalorder %s17, 0
      %p44 = por %p42, %p43
      %p45 = scmp.ne.s32.totalorder %s37, %s39
      %p46 = scmp.eq.s32.totalorder %s22, 1
      %p47 = por %p45, %p46
      %p48 = scmp.ne.s32.totalorder %s39, %s40
      %p49 = scmp.eq.s32.totalorder %s22, 0
      %p50 = por %p48, %p49
      %p51 = scmp.ne.s32.totalorder %s39, %s40
      %p52 = scmp.eq.s32.totalorder %s23, 1
      %p53 = por %p51, %p52
      %p55 = scmp.ne.s32.totalorder %s40, %s54
      %p56 = scmp.eq.s32.totalorder %s23, 0
      %p57 = por %p55, %p56
      %s59 = sadd.s32 %s58, 1
      %p62 = scmp.eq.s32.totalorder %s17, 1
      %p63 = scmp.ne.s32.totalorder %s58, %s60
      %p64 = scmp.eq.s32.totalorder %s17, 0
      %p65 = por %p63, %p64
      %p66 = scmp.ne.s32.totalorder %s58, %s60
      %p67 = scmp.eq.s32.totalorder %s22, 1
      %p68 = por %p66, %p67
      %p69 = scmp.ne.s32.totalorder %s60, %s61
      %p70 = scmp.eq.s32.totalorder %s22, 0
      %p71 = por %p69, %p70
      %p72 = scmp.ne.s32.totalorder %s60, %s61
      %p73 = scmp.eq.s32.totalorder %s23, 1
      %p74 = por %p72, %p73
      %p76 = scmp.ne.s32.totalorder %s61, %s75
      %p77 = scmp.eq.s32.totalorder %s23, 0
      %p78 = por %p76, %p77
      %s79 = ssub.s32 %s24, %s36
      %s80 = ssub.s32 %s25, %s32
      %s81 = sor.u32 %s79, %s80
      %p82 = scmp.eq.s32.totalorder %s81, 0
      %s84 = sadd.s32 %s83, 1
      %s85 = scalar_select %p82, %s83, %s84
      %p88 = pneg %p82
      %p89 = scmp.eq.s32.totalorder %s17, 1
      %p90 = por %p88, %p89
      %p91 = scmp.ne.s32.totalorder %s83, %s86
      %p92 = scmp.eq.s32.totalorder %s17, 0
      %p93 = por %p91, %p92
      %p94 = scmp.ne.s32.totalorder %s83, %s86
      %p95 = scmp.eq.s32.totalorder %s22, 1
      %p96 = por %p94, %p95
      %p97 = scmp.ne.s32.totalorder %s86, %s87
      %p98 = scmp.eq.s32.totalorder %s22, 0
      %p99 = por %p97, %p98
      %p100 = scmp.ne.s32.totalorder %s86, %s87
      %p101 = scmp.eq.s32.totalorder %s23, 1
      %p102 = por %p100, %p101
      %p104 = scmp.ne.s32.totalorder %s87, %s103
      %p105 = scmp.eq.s32.totalorder %s23, 0
      %p106 = por %p104, %p105
      %s107 = ssub.s32 %s24, %s36
      %s108 = ssub.s32 %s25, %s32
      %s109 = sor.u32 %s107, %s108
      %p110 = scmp.eq.s32.totalorder %s109, 0
      %s112 = sadd.s32 %s111, 1
      %s113 = scalar_select %p110, %s111, %s112
      %p116 = pneg %p110
      %p117 = scmp.eq.s32.totalorder %s17, 1
      %p118 = por %p116, %p117
      %p119 = scmp.ne.s32.totalorder %s111, %s114
      %p120 = scmp.eq.s32.totalorder %s17, 0
      %p121 = por %p119, %p120
      %p122 = scmp.ne.s32.totalorder %s111, %s114
      %p123 = scmp.eq.s32.totalorder %s22, 1
      %p124 = por %p122, %p123
      %p125 = scmp.ne.s32.totalorder %s114, %s115
      %p126 = scmp.eq.s32.totalorder %s22, 0
      %p127 = por %p125, %p126
      %p128 = scmp.ne.s32.totalorder %s114, %s115
      %p129 = scmp.eq.s32.totalorder %s23, 1
      %p130 = por %p128, %p129
      %p132 = scmp.ne.s32.totalorder %s115, %s131
      %p133 = scmp.eq.s32.totalorder %s23, 0
      %p134 = por %p132, %p133
      %p135 = scmp.le.s32.totalorder 1, %s17
      %p136 = scmp.lt.s32.totalorder %s17, 3
      %p137 = pnand %p135, %p136
      %p138 = pneg %p137
      // Predicated region
      $region9: #{tpu_custom_call.1} parent=5 // pred_check
        _
      $region10: #{tpu_custom_call.1} parent=5 // pred_check_branch
        %140 = sbr.rel (%p137) target = $region12
      $region11: #{tpu_custom_call.1} parent=5 // pred_region
        %s141 = ssub.s32 %s17, 1
        // Predicated region
        $region13: #{tpu_custom_call.1} parent=11 // pred_check
          %p142 = pneg %p50
        $region14: #{tpu_custom_call.1} parent=11 // pred_check_branch
          %144 = sbr.rel (%p142) target = $region16
        $region15: #{tpu_custom_call.1} parent=11 // pred_region
          %s146 = ssub.s32 16, 16
          %147 = vsyncadd [#allocation6], %s146
          %150 = dma.hbm_to_smem %s0, 16, [#allocation3], [#allocation6]
        $region16: #{tpu_custom_call.1} parent=11 // pred_fallthru
          _
        // Predicated region
        $region17: #{tpu_custom_call.1} parent=11 // pred_check
          %p151 = pneg %p71
        $region18: #{tpu_custom_call.1} parent=11 // pred_check_branch
          %153 = sbr.rel (%p151) target = $region20
        $region19: #{tpu_custom_call.1} parent=11 // pred_region
          %s155 = ssub.s32 16, 16
          %156 = vsyncadd [#allocation7], %s155
          %s158 = sshll.u32 %s1, 4
          %s159 = int_to_ptr.vmem [resolvable:$true] %s158
          %161 = dma.vmem_to_smem %s159, 16, [#allocation8], [#allocation7]
        $region20: #{tpu_custom_call.1} parent=11 // pred_fallthru
          _
      $region12: #{tpu_custom_call.1} parent=5 // pred_fallthru
        _
      %p162 = scmp.lt.s32.totalorder %s17, 2
      // Predicated region
      $region21: #{tpu_custom_call.1} parent=5 // pred_check
        %p163 = pneg %p162
      $region22: #{tpu_custom_call.1} parent=5 // pred_check_branch
        %165 = sbr.rel (%p163) target = $region24
      $region23: #{tpu_custom_call.1} parent=5 // pred_region
        // Predicated region
        $region25: #{tpu_custom_call.1} parent=23 // pred_check
          %p166 = pneg %p93
        $region26: #{tpu_custom_call.1} parent=23 // pred_check_branch
          %168 = sbr.rel (%p166) target = $region28
        $region27: #{tpu_custom_call.1} parent=23 // pred_region
          %s169 = sand.u32 %s83, 1
          %s170 = scalar_lea.sflag [#allocation4], %s169
          %s171 = sand.u32 %s83, 1
          %s172 = smul.addr %s171, 64
          %s173 = scalar_lea.vmem [#allocation9], %s172
          %s174 = smul.u32 4, %s25
          %s176 = ssub.s32 1024, 1024
          %177 = vsyncadd %s170, %s176
          %s178 = smul.addr %s174, 2
          %s179 = smul.addr %s24, 8
          %s180 = sadd.s32 %s178, %s179
          %s181 = smul.addr %s180, 128
          %s182 = scalar_lea.hbm %s2, %s181
          %s183 = sshll.u32 %s173, 4
          %s184 = int_to_ptr.vmem [resolvable:$true] %s183
          %189 = dma.hbm_to_vmem [thread:$0]  %s182, 1024, %s184, %s170, 128, 128, 8
        $region28: #{tpu_custom_call.1} parent=23 // pred_fallthru
          _
      $region24: #{tpu_custom_call.1} parent=5 // pred_fallthru
        _
      %p190 = scmp.le.s32.totalorder 1, %s17
      %p191 = scmp.lt.s32.totalorder %s17, 3
      %p192 = pnand %p190, %p191
      %p193 = pneg %p192
      // Predicated region
      $region29: #{tpu_custom_call.1} parent=5 // pred_check
        _
      $region30: #{tpu_custom_call.1} parent=5 // pred_check_branch
        %195 = sbr.rel (%p192) target = $region32
      $region31: #{tpu_custom_call.1} parent=5 // pred_region
        %s196 = ssub.s32 %s17, 1
        // Predicated region
        $region33: #{tpu_custom_call.1} parent=31 // pred_check
          %p197 = pneg %p50
        $region34: #{tpu_custom_call.1} parent=31 // pred_check_branch
          %199 = sbr.rel (%p197) target = $region36
        $region35: #{tpu_custom_call.1} parent=31 // pred_region
          %200 = dma.done [#allocation6], 16
        $region36: #{tpu_custom_call.1} parent=31 // pred_fallthru
          _
        // Predicated region
        $region37: #{tpu_custom_call.1} parent=31 // pred_check
          %p201 = pneg %p71
        $region38: #{tpu_custom_call.1} parent=31 // pred_check_branch
          %203 = sbr.rel (%p201) target = $region40
        $region39: #{tpu_custom_call.1} parent=31 // pred_region
          %204 = dma.done [#allocation7], 16
        $region40: #{tpu_custom_call.1} parent=31 // pred_fallthru
          _
        %s205 = sand.u32 %s86, 1
        %s206 = scalar_lea.sflag [#allocation4], %s205
        %s207 = sand.u32 %s86, 1
        %s208 = smul.addr %s207, 64
        %s209 = scalar_lea.vmem [#allocation9], %s208
        // Predicated region
        $region41: #{tpu_custom_call.1} parent=31 // pred_check
          %p210 = pneg %p99
        $region42: #{tpu_custom_call.1} parent=31 // pred_check_branch
          %212 = sbr.rel (%p210) target = $region44
        $region43: #{tpu_custom_call.1} parent=31 // pred_region
          %213 = dma.done %s206, 1024
        $region44: #{tpu_custom_call.1} parent=31 // pred_fallthru
          _
        %214 = sfence
        %p215 = pneg %p50
        %p216 = pneg %p47
        %p217 = pneg %p71
        %p218 = pneg %p68
        %s219 = sand.u32 %s86, 1
        %s220 = scalar_lea.sflag [#allocation4], %s219
        %s221 = sand.u32 %s86, 1
        %s222 = smul.addr %s221, 64
        %s223 = scalar_lea.vmem [#allocation9], %s222
        %p224 = pneg %p99
        %p225 = pneg %p96
        %p226 = pneg %p127
        %p227 = pneg %p124
        %s228 = sand.u32 %s114, 1
        %s229 = scalar_lea.sflag [#allocation5], %s228
        %s230 = sand.u32 %s114, 1
        %s231 = smul.addr %s230, 64
        %s232 = scalar_lea.vmem [#allocation10], %s231
        %s233 = smul.u32 4, %s27
        %s234 = smul.u32 4, %s27
        %235 = vst [vmem:[#allocation2] sm:$0xff] 0.0
        %236 = vst [vmem:[#allocation2 + $0x8] sm:$0xff] 0.0
        %237 = vst [vmem:[#allocation2 + $0x10] sm:$0xff] 0.0
        %238 = vst [vmem:[#allocation2 + $0x18] sm:$0xff] 0.0
        %v239 = vld [vmem:[%s209] sm:$0xff]
        %v240 = vld [vmem:[%s209 + $0x8] sm:$0xff]
        %vm241 = vcmask 130048
        %242 = vst.msk [vmem:[#allocation2 + $0x8] sm:$0xff] %vm241, %v239
        %243 = vst.msk [vmem:[#allocation2 + $0x10] sm:$0xff] %vm241, %v240
        %s244 = smul.u32 %s27, 4
        %s245 = smul.u32 %s27, 36
        %s246 = sld [smem:[#allocation3 + %s245]]
        %s247 = sadd.s32 %s245, 1
        %s248 = sld [smem:[#allocation3 + %s247]]
        %s249 = sadd.s32 %s245, 2
        %s250 = sld [smem:[#allocation3 + %s249]]
        %s251 = sadd.s32 %s245, 3
        %s252 = sld [smem:[#allocation3 + %s251]]
        %s253 = sadd.s32 %s245, 4
        %s254 = sld [smem:[#allocation3 + %s253]]
        %s255 = sadd.s32 %s245, 5
        %s256 = sld [smem:[#allocation3 + %s255]]
        %s257 = sadd.s32 %s245, 6
        %s258 = sld [smem:[#allocation3 + %s257]]
        %s259 = sadd.s32 %s245, 7
        %s260 = sld [smem:[#allocation3 + %s259]]
        %s261 = sadd.s32 %s245, 8
        %s262 = sld [smem:[#allocation3 + %s261]]
        %s263 = sld [smem:[#allocation8 + %s244]]
        %v264 = vstv %s263
        %v265 = vld [vmem:[#allocation2 + $0x7] sm:$0xff]
        %266 = vrot.lane.b32.xlu0 %v265, 1
        %v267 = vpop.permute.xlu0 %266
        %v268 = vstv %s246
        %v269 = vmul.f32 %v267, %v268
        %v270 = vadd.f32 %v264, %v269
        %v271 = vstv %s248
        %v272 = vmul.f32 %v265, %v271
        %v273 = vadd.f32 %v270, %v272
        %274 = vrot.lane.b32.xlu0 %v265, 127
        %v275 = vpop.permute.xlu0 %274
        %v276 = vstv %s250
        %v277 = vmul.f32 %v275, %v276
        %v278 = vadd.f32 %v273, %v277
        %v279 = vld [vmem:[#allocation2 + $0x8] sm:$0xff]
        %280 = vrot.lane.b32.xlu0 %v279, 1
        %v281 = vpop.permute.xlu0 %280
        %v282 = vstv %s252
        %v283 = vmul.f32 %v281, %v282
        %v284 = vadd.f32 %v278, %v283
        %v285 = vstv %s254
        %v286 = vmul.f32 %v279, %v285
        %v287 = vadd.f32 %v284, %v286
        %288 = vrot.lane.b32.xlu0 %v279, 127
        %v289 = vpop.permute.xlu0 %288
        %v290 = vstv %s256
        %v291 = vmul.f32 %v289, %v290
        %v292 = vadd.f32 %v287, %v291
        %v293 = vld [vmem:[#allocation2 + $0x9] sm:$0xff]
        %294 = vrot.lane.b32.xlu0 %v293, 1
        %v295 = vpop.permute.xlu0 %294
        %v296 = vstv %s258
        %v297 = vmul.f32 %v295, %v296
        %v298 = vadd.f32 %v292, %v297
        %v299 = vstv %s260
        %v300 = vmul.f32 %v293, %v299
        %v301 = vadd.f32 %v298, %v300
        %302 = vrot.lane.b32.xlu0 %v293, 127
        %v303 = vpop.permute.xlu0 %302
        %v304 = vstv %s262
        %v305 = vmul.f32 %v303, %v304
        %v306 = vadd.f32 %v301, %v305
        %307 = vst.msk [vmem:[%s232] sm:$0xff] %vm241, %v306
        %v308 = vld [vmem:[#allocation2 + $0xf] sm:$0xff]
        %309 = vrot.lane.b32.xlu0 %v308, 1
        %v310 = vpop.permute.xlu0 %309
        %v311 = vmul.f32 %v310, %v268
        %v312 = vadd.f32 %v264, %v311
        %v313 = vmul.f32 %v308, %v271
        %v314 = vadd.f32 %v312, %v313
        %315 = vrot.lane.b32.xlu0 %v308, 127
        %v316 = vpop.permute.xlu0 %315
        %v317 = vmul.f32 %v316, %v276
        %v318 = vadd.f32 %v314, %v317
        %v319 = vld [vmem:[#allocation2 + $0x10] sm:$0xff]
        %320 = vrot.lane.b32.xlu0 %v319, 1
        %v321 = vpop.permute.xlu0 %320
        %v322 = vmul.f32 %v321, %v282
        %v323 = vadd.f32 %v318, %v322
        %v324 = vmul.f32 %v319, %v285
        %v325 = vadd.f32 %v323, %v324
        %326 = vrot.lane.b32.xlu0 %v319, 127
        %v327 = vpop.permute.xlu0 %326
        %v328 = vmul.f32 %v327, %v290
        %v329 = vadd.f32 %v325, %v328
        %v330 = vld [vmem:[#allocation2 + $0x11] sm:$0xff]
        %331 = vrot.lane.b32.xlu0 %v330, 1
        %v332 = vpop.permute.xlu0 %331
        %v333 = vmul.f32 %v332, %v296
        %v334 = vadd.f32 %v329, %v333
        %v335 = vmul.f32 %v330, %v299
        %v336 = vadd.f32 %v334, %v335
        %337 = vrot.lane.b32.xlu0 %v330, 127
        %v338 = vpop.permute.xlu0 %337
        %v339 = vmul.f32 %v338, %v304
        %v340 = vadd.f32 %v336, %v339
        %341 = vst.msk [vmem:[%s232 + $0x8] sm:$0xff] %vm241, %v340
        %s342 = scalar_lea.vmem %s209, 16 [#allocation9]
        %v343 = vld [vmem:[%s342] sm:$0xff]
        %v344 = vld [vmem:[%s342 + $0x8] sm:$0xff]
        %345 = vst.msk [vmem:[#allocation2 + $0x8] sm:$0xff] %vm241, %v343
        %346 = vst.msk [vmem:[#allocation2 + $0x10] sm:$0xff] %vm241, %v344
        %s347 = sadd.s32 %s244, 1
        %s348 = smul.u32 %s347, 9
        %s349 = sld [smem:[#allocation3 + %s348]]
        %s350 = sadd.s32 %s348, 1
        %s351 = sld [smem:[#allocation3 + %s350]]
        %s352 = sadd.s32 %s348, 2
        %s353 = sld [smem:[#allocation3 + %s352]]
        %s354 = sadd.s32 %s348, 3
        %s355 = sld [smem:[#allocation3 + %s354]]
        %s356 = sadd.s32 %s348, 4
        %s357 = sld [smem:[#allocation3 + %s356]]
        %s358 = sadd.s32 %s348, 5
        %s359 = sld [smem:[#allocation3 + %s358]]
        %s360 = sadd.s32 %s348, 6
        %s361 = sld [smem:[#allocation3 + %s360]]
        %s362 = sadd.s32 %s348, 7
        %s363 = sld [smem:[#allocation3 + %s362]]
        %s364 = sadd.s32 %s348, 8
        %s365 = sld [smem:[#allocation3 + %s364]]
        %s366 = sld [smem:[#allocation8 + %s347]]
        %v367 = vstv %s366
        %v368 = vld [vmem:[#allocation2 + $0x7] sm:$0xff]
        %369 = vrot.lane.b32.xlu0 %v368, 1
        %v370 = vpop.permute.xlu0 %369
        %v371 = vstv %s349
        %v372 = vmul.f32 %v370, %v371
        %v373 = vadd.f32 %v367, %v372
        %v374 = vstv %s351
        %v375 = vmul.f32 %v368, %v374
        %v376 = vadd.f32 %v373, %v375
        %377 = vrot.lane.b32.xlu0 %v368, 127
        %v378 = vpop.permute.xlu0 %377
        %v379 = vstv %s353
        %v380 = vmul.f32 %v378, %v379
        %v381 = vadd.f32 %v376, %v380
        %v382 = vld [vmem:[#allocation2 + $0x8] sm:$0xff]
        %383 = vrot.lane.b32.xlu0 %v382, 1
        %v384 = vpop.permute.xlu0 %383
        %v385 = vstv %s355
        %v386 = vmul.f32 %v384, %v385
        %v387 = vadd.f32 %v381, %v386
        %v388 = vstv %s357
        %v389 = vmul.f32 %v382, %v388
        %v390 = vadd.f32 %v387, %v389
        %391 = vrot.lane.b32.xlu0 %v382, 127
        %v392 = vpop.permute.xlu0 %391
        %v393 = vstv %s359
        %v394 = vmul.f32 %v392, %v393
        %v395 = vadd.f32 %v390, %v394
        %v396 = vld [vmem:[#allocation2 + $0x9] sm:$0xff]
        %397 = vrot.lane.b32.xlu0 %v396, 1
        %v398 = vpop.permute.xlu0 %397
        %v399 = vstv %s361
        %v400 = vmul.f32 %v398, %v399
        %v401 = vadd.f32 %v395, %v400
        %v402 = vstv %s363
        %v403 = vmul.f32 %v396, %v402
        %v404 = vadd.f32 %v401, %v403
        %405 = vrot.lane.b32.xlu0 %v396, 127
        %v406 = vpop.permute.xlu0 %405
        %v407 = vstv %s365
        %v408 = vmul.f32 %v406, %v407
        %v409 = vadd.f32 %v404, %v408
        %s410 = scalar_lea.vmem %s232, 16 [#allocation10]
        %411 = vst.msk [vmem:[%s410] sm:$0xff] %vm241, %v409
        %v412 = vld [vmem:[#allocation2 + $0xf] sm:$0xff]
        %413 = vrot.lane.b32.xlu0 %v412, 1
        %v414 = vpop.permute.xlu0 %413
        %v415 = vmul.f32 %v414, %v371
        %v416 = vadd.f32 %v367, %v415
        %v417 = vmul.f32 %v412, %v374
        %v418 = vadd.f32 %v416, %v417
        %419 = vrot.lane.b32.xlu0 %v412, 127
        %v420 = vpop.permute.xlu0 %419
        %v421 = vmul.f32 %v420, %v379
        %v422 = vadd.f32 %v418, %v421
        %v423 = vld [vmem:[#allocation2 + $0x10] sm:$0xff]
        %424 = vrot.lane.b32.xlu0 %v423, 1
        %v425 = vpop.permute.xlu0 %424
        %v426 = vmul.f32 %v425, %v385
        %v427 = vadd.f32 %v422, %v426
        %v428 = vmul.f32 %v423, %v388
        %v429 = vadd.f32 %v427, %v428
        %430 = vrot.lane.b32.xlu0 %v423, 127
        %v431 = vpop.permute.xlu0 %430
        %v432 = vmul.f32 %v431, %v393
        %v433 = vadd.f32 %v429, %v432
        %v434 = vld [vmem:[#allocation2 + $0x11] sm:$0xff]
        %435 = vrot.lane.b32.xlu0 %v434, 1
        %v436 = vpop.permute.xlu0 %435
        %v437 = vmul.f32 %v436, %v399
        %v438 = vadd.f32 %v433, %v437
        %v439 = vmul.f32 %v434, %v402
        %v440 = vadd.f32 %v438, %v439
        %441 = vrot.lane.b32.xlu0 %v434, 127
        %v442 = vpop.permute.xlu0 %441
        %v443 = vmul.f32 %v442, %v407
        %v444 = vadd.f32 %v440, %v443
        %445 = vst.msk [vmem:[%s410 + $0x8] sm:$0xff] %vm241, %v444
        %s446 = scalar_lea.vmem %s209, 32 [#allocation9]
        %v447 = vld [vmem:[%s446] sm:$0xff]
        %v448 = vld [vmem:[%s446 + $0x8] sm:$0xff]
        %449 = vst.msk [vmem:[#allocation2 + $0x8] sm:$0xff] %vm241, %v447
        %450 = vst.msk [vmem:[#allocation2 + $0x10] sm:$0xff] %vm241, %v448
        %s451 = sadd.s32 %s244, 2
        %s452 = smul.u32 %s451, 9
        %s453 = sld [smem:[#allocation3 + %s452]]
        %s454 = sadd.s32 %s452, 1
        %s455 = sld [smem:[#allocation3 + %s454]]
        %s456 = sadd.s32 %s452, 2
        %s457 = sld [smem:[#allocation3 + %s456]]
        %s458 = sadd.s32 %s452, 3
        %s459 = sld [smem:[#allocation3 + %s458]]
        %s460 = sadd.s32 %s452, 4
        %s461 = sld [smem:[#allocation3 + %s460]]
        %s462 = sadd.s32 %s452, 5
        %s463 = sld [smem:[#allocation3 + %s462]]
        %s464 = sadd.s32 %s452, 6
        %s465 = sld [smem:[#allocation3 + %s464]]
        %s466 = sadd.s32 %s452, 7
        %s467 = sld [smem:[#allocation3 + %s466]]
        %s468 = sadd.s32 %s452, 8
        %s469 = sld [smem:[#allocation3 + %s468]]
        %s470 = sld [smem:[#allocation8 + %s451]]
        %v471 = vstv %s470
        %v472 = vld [vmem:[#allocation2 + $0x7] sm:$0xff]
        %473 = vrot.lane.b32.xlu0 %v472, 1
        %v474 = vpop.permute.xlu0 %473
        %v475 = vstv %s453
        %v476 = vmul.f32 %v474, %v475
        %v477 = vadd.f32 %v471, %v476
        %v478 = vstv %s455
        %v479 = vmul.f32 %v472, %v478
        %v480 = vadd.f32 %v477, %v479
        %481 = vrot.lane.b32.xlu0 %v472, 127
        %v482 = vpop.permute.xlu0 %481
        %v483 = vstv %s457
        %v484 = vmul.f32 %v482, %v483
        %v485 = vadd.f32 %v480, %v484
        %v486 = vld [vmem:[#allocation2 + $0x8] sm:$0xff]
        %487 = vrot.lane.b32.xlu0 %v486, 1
        %v488 = vpop.permute.xlu0 %487
        %v489 = vstv %s459
        %v490 = vmul.f32 %v488, %v489
        %v491 = vadd.f32 %v485, %v490
        %v492 = vstv %s461
        %v493 = vmul.f32 %v486, %v492
        %v494 = vadd.f32 %v491, %v493
        %495 = vrot.lane.b32.xlu0 %v486, 127
        %v496 = vpop.permute.xlu0 %495
        %v497 = vstv %s463
        %v498 = vmul.f32 %v496, %v497
        %v499 = vadd.f32 %v494, %v498
        %v500 = vld [vmem:[#allocation2 + $0x9] sm:$0xff]
        %501 = vrot.lane.b32.xlu0 %v500, 1
        %v502 = vpop.permute.xlu0 %501
        %v503 = vstv %s465
        %v504 = vmul.f32 %v502, %v503
        %v505 = vadd.f32 %v499, %v504
        %v506 = vstv %s467
        %v507 = vmul.f32 %v500, %v506
        %v508 = vadd.f32 %v505, %v507
        %509 = vrot.lane.b32.xlu0 %v500, 127
        %v510 = vpop.permute.xlu0 %509
        %v511 = vstv %s469
        %v512 = vmul.f32 %v510, %v511
        %v513 = vadd.f32 %v508, %v512
        %s514 = scalar_lea.vmem %s232, 32 [#allocation10]
        %515 = vst.msk [vmem:[%s514] sm:$0xff] %vm241, %v513
        %v516 = vld [vmem:[#allocation2 + $0xf] sm:$0xff]
        %517 = vrot.lane.b32.xlu0 %v516, 1
        %v518 = vpop.permute.xlu0 %517
        %v519 = vmul.f32 %v518, %v475
        %v520 = vadd.f32 %v471, %v519
        %v521 = vmul.f32 %v516, %v478
        %v522 = vadd.f32 %v520, %v521
        %523 = vrot.lane.b32.xlu0 %v516, 127
        %v524 = vpop.permute.xlu0 %523
        %v525 = vmul.f32 %v524, %v483
        %v526 = vadd.f32 %v522, %v525
        %v527 = vld [vmem:[#allocation2 + $0x10] sm:$0xff]
        %528 = vrot.lane.b32.xlu0 %v527, 1
        %v529 = vpop.permute.xlu0 %528
        %v530 = vmul.f32 %v529, %v489
        %v531 = vadd.f32 %v526, %v530
        %v532 = vmul.f32 %v527, %v492
        %v533 = vadd.f32 %v531, %v532
        %534 = vrot.lane.b32.xlu0 %v527, 127
        %v535 = vpop.permute.xlu0 %534
        %v536 = vmul.f32 %v535, %v497
        %v537 = vadd.f32 %v533, %v536
        %v538 = vld [vmem:[#allocation2 + $0x11] sm:$0xff]
        %539 = vrot.lane.b32.xlu0 %v538, 1
        %v540 = vpop.permute.xlu0 %539
        %v541 = vmul.f32 %v540, %v503
        %v542 = vadd.f32 %v537, %v541
        %v543 = vmul.f32 %v538, %v506
        %v544 = vadd.f32 %v542, %v543
        %545 = vrot.lane.b32.xlu0 %v538, 127
        %v546 = vpop.permute.xlu0 %545
        %v547 = vmul.f32 %v546, %v511
        %v548 = vadd.f32 %v544, %v547
        %549 = vst.msk [vmem:[%s514 + $0x8] sm:$0xff] %vm241, %v548
        %s550 = scalar_lea.vmem %s209, 48 [#allocation9]
        %v551 = vld [vmem:[%s550] sm:$0xff]
        %v552 = vld [vmem:[%s550 + $0x8] sm:$0xff]
        %553 = vst.msk [vmem:[#allocation2 + $0x8] sm:$0xff] %vm241, %v551
        %554 = vst.msk [vmem:[#allocation2 + $0x10] sm:$0xff] %vm241, %v552
        %s555 = sadd.s32 %s244, 3
        %s556 = smul.u32 %s555, 9
        %s557 = sld [smem:[#allocation3 + %s556]]
        %s558 = sadd.s32 %s556, 1
        %s559 = sld [smem:[#allocation3 + %s558]]
        %s560 = sadd.s32 %s556, 2
        %s561 = sld [smem:[#allocation3 + %s560]]
        %s562 = sadd.s32 %s556, 3
        %s563 = sld [smem:[#allocation3 + %s562]]
        %s564 = sadd.s32 %s556, 4
        %s565 = sld [smem:[#allocation3 + %s564]]
        %s566 = sadd.s32 %s556, 5
        %s567 = sld [smem:[#allocation3 + %s566]]
        %s568 = sadd.s32 %s556, 6
        %s569 = sld [smem:[#allocation3 + %s568]]
        %s570 = sadd.s32 %s556, 7
        %s571 = sld [smem:[#allocation3 + %s570]]
        %s572 = sadd.s32 %s556, 8
        %s573 = sld [smem:[#allocation3 + %s572]]
        %s574 = sld [smem:[#allocation8 + %s555]]
        %v575 = vstv %s574
        %v576 = vld [vmem:[#allocation2 + $0x7] sm:$0xff]
        %577 = vrot.lane.b32.xlu0 %v576, 1
        %v578 = vpop.permute.xlu0 %577
        %v579 = vstv %s557
        %v580 = vmul.f32 %v578, %v579
        %v581 = vadd.f32 %v575, %v580
        %v582 = vstv %s559
        %v583 = vmul.f32 %v576, %v582
        %v584 = vadd.f32 %v581, %v583
        %585 = vrot.lane.b32.xlu0 %v576, 127
        %v586 = vpop.permute.xlu0 %585
        %v587 = vstv %s561
        %v588 = vmul.f32 %v586, %v587
        %v589 = vadd.f32 %v584, %v588
        %v590 = vld [vmem:[#allocation2 + $0x8] sm:$0xff]
        %591 = vrot.lane.b32.xlu0 %v590, 1
        %v592 = vpop.permute.xlu0 %591
        %v593 = vstv %s563
        %v594 = vmul.f32 %v592, %v593
        %v595 = vadd.f32 %v589, %v594
        %v596 = vstv %s565
        %v597 = vmul.f32 %v590, %v596
        %v598 = vadd.f32 %v595, %v597
        %599 = vrot.lane.b32.xlu0 %v590, 127
        %v600 = vpop.permute.xlu0 %599
        %v601 = vstv %s567
        %v602 = vmul.f32 %v600, %v601
        %v603 = vadd.f32 %v598, %v602
        %v604 = vld [vmem:[#allocation2 + $0x9] sm:$0xff]
        %605 = vrot.lane.b32.xlu0 %v604, 1
        %v606 = vpop.permute.xlu0 %605
        %v607 = vstv %s569
        %v608 = vmul.f32 %v606, %v607
        %v609 = vadd.f32 %v603, %v608
        %v610 = vstv %s571
        %v611 = vmul.f32 %v604, %v610
        %v612 = vadd.f32 %v609, %v611
        %613 = vrot.lane.b32.xlu0 %v604, 127
        %v614 = vpop.permute.xlu0 %613
        %v615 = vstv %s573
        %v616 = vmul.f32 %v614, %v615
        %v617 = vadd.f32 %v612, %v616
        %s618 = scalar_lea.vmem %s232, 48 [#allocation10]
        %619 = vst.msk [vmem:[%s618] sm:$0xff] %vm241, %v617
        %v620 = vld [vmem:[#allocation2 + $0xf] sm:$0xff]
        %621 = vrot.lane.b32.xlu0 %v620, 1
        %v622 = vpop.permute.xlu0 %621
        %v623 = vmul.f32 %v622, %v579
        %v624 = vadd.f32 %v575, %v623
        %v625 = vmul.f32 %v620, %v582
        %v626 = vadd.f32 %v624, %v625
        %627 = vrot.lane.b32.xlu0 %v620, 127
        %v628 = vpop.permute.xlu0 %627
        %v629 = vmul.f32 %v628, %v587
        %v630 = vadd.f32 %v626, %v629
        %v631 = vld [vmem:[#allocation2 + $0x10] sm:$0xff]
        %632 = vrot.lane.b32.xlu0 %v631, 1
        %v633 = vpop.permute.xlu0 %632
        %v634 = vmul.f32 %v633, %v593
        %v635 = vadd.f32 %v630, %v634
        %v636 = vmul.f32 %v631, %v596
        %v637 = vadd.f32 %v635, %v636
        %638 = vrot.lane.b32.xlu0 %v631, 127
        %v639 = vpop.permute.xlu0 %638
        %v640 = vmul.f32 %v639, %v601
        %v641 = vadd.f32 %v637, %v640
        %v642 = vld [vmem:[#allocation2 + $0x11] sm:$0xff]
        %643 = vrot.lane.b32.xlu0 %v642, 1
        %v644 = vpop.permute.xlu0 %643
        %v645 = vmul.f32 %v644, %v607
        %v646 = vadd.f32 %v641, %v645
        %v647 = vmul.f32 %v642, %v610
        %v648 = vadd.f32 %v646, %v647
        %649 = vrot.lane.b32.xlu0 %v642, 127
        %v650 = vpop.permute.xlu0 %649
        %v651 = vmul.f32 %v650, %v615
        %v652 = vadd.f32 %v648, %v651
        %653 = vst.msk [vmem:[%s618 + $0x8] sm:$0xff] %vm241, %v652
        %s654 = sand.u32 %s114, 1
        %s655 = scalar_lea.sflag [#allocation5], %s654
        %s656 = sand.u32 %s114, 1
        %s657 = smul.addr %s656, 64
        %s658 = scalar_lea.vmem [#allocation10], %s657
        // Predicated region
        $region45: #{tpu_custom_call.1} parent=31 // pred_check
          %p659 = pneg %p124
        $region46: #{tpu_custom_call.1} parent=31 // pred_check_branch
          %661 = sbr.rel (%p659) target = $region48
        $region47: #{tpu_custom_call.1} parent=31 // pred_region
          %s662 = smul.u32 4, %s27
          %s664 = ssub.s32 1024, 1024
          %665 = vsyncadd %s655, %s664
          %s666 = smul.addr %s662, 2
          %s667 = smul.addr %s26, 8
          %s668 = sadd.s32 %s666, %s667
          %s669 = smul.addr %s668, 128
          %s670 = scalar_lea.hbm %s3, %s669
          %s671 = sshll.u32 %s658, 4
          %s672 = int_to_ptr.vmem [resolvable:$true] %s671
          %677 = dma.vmem_to_hbm [thread:$0]  %s672, 1024, %s670, %s655, 128, 128, 8
        $region48: #{tpu_custom_call.1} parent=31 // pred_fallthru
          _
      $region32: #{tpu_custom_call.1} parent=5 // pred_fallthru
        _
      %p678 = scmp.le.s32.totalorder 2, %s17
      // Predicated region
      $region49: #{tpu_custom_call.1} parent=5 // pred_check
        %p679 = pneg %p678
      $region50: #{tpu_custom_call.1} parent=5 // pred_check_branch
        %681 = sbr.rel (%p679) target = $region52
      $region51: #{tpu_custom_call.1} parent=5 // pred_region
        %s682 = ssub.s32 %s17, 2
        // Predicated region
        $region53: #{tpu_custom_call.1} parent=51 // pred_check
          %p683 = pneg %p130
        $region54: #{tpu_custom_call.1} parent=51 // pred_check_branch
          %685 = sbr.rel (%p683) target = $region56
        $region55: #{tpu_custom_call.1} parent=51 // pred_region
          %s686 = sand.u32 %s115, 1
          %s687 = scalar_lea.sflag [#allocation5], %s686
          %s688 = sand.u32 %s115, 1
          %s689 = smul.addr %s688, 64
          %s690 = scalar_lea.vmem [#allocation10], %s689
          %691 = dma.done %s687, 1024
        $region56: #{tpu_custom_call.1} parent=51 // pred_fallthru
          _
      $region52: #{tpu_custom_call.1} parent=5 // pred_fallthru
        _
    $region6: #{tpu_custom_call.1} parent=1 // loop_footer
      %s21 = sadd.s32 1, %s17
    $region7: #{tpu_custom_call.1} parent=1 // loop_footer_branch
      %16 = sbr.rel target = $region3
    $region8: #{tpu_custom_call.1} parent=1 // loop_exit
      _
    %692 = vsyncpa [#allocation4], 1
    %s693 = scalar_lea.sflag [#allocation4], 1
    %694 = vsyncpa %s693, 1
    %695 = vsyncpa [#allocation5], 1
    %s696 = scalar_lea.sflag [#allocation5], 1
    %697 = vsyncpa %s696, 1
    %698 = vsyncpa [#allocation6], 1
    %s699 = scalar_lea.sflag [#allocation6], 1
    %700 = vsyncpa %s699, 1
    %701 = vsyncpa [#allocation7], 1
    %s702 = scalar_lea.sflag [#allocation7], 1
    %703 = vsyncpa %s702, 1

</llo_original>
